<compile_context>
chip_gen: v5e
topology: v5e:2x2
jax: 0.10.0
libtpu: 0.0.40
codegen_flags: <defaults>
</compile_context>

<pallas_src>
import math

import jax
import jax.numpy as jnp
import numpy as np
from jax import lax
from jax.experimental import pallas as pl
from jax.experimental.pallas import tpu as pltpu


def _round_up(x, m):
    return (x + m - 1) // m * m


def interest_evolving_kernel(
    q_ref,      # (TB, Dp)      f32
    keys_ref,   # (T, TB, Dp)   f32  (time-major batch tile)
    kl_ref,     # (TB, 1)       i32  keys_length
    wih_ref,    # (Dp, 3*Dp)    f32  fused GRU input weights  [r | z | n]
    whh_ref,    # (Dp, 3*Dp)    f32  fused GRU hidden weights [r | z | n]
    bi_ref,     # (1, 3*Dp)     f32  [bir+bhr | biz+bhz | bin]
    bhn_ref,    # (1, Dp)       f32  b_hn (must stay inside r*(...))
    wq_ref,     # (Dp, H1)      f32  w1q + w1d   (query fold)
    wk_ref,     # (Dp, H1)      f32  w1k - w1d   (interest fold)
    wp_ref,     # (Dp, H1)      f32  w1p         (q*interest term)
    b1_ref,     # (1, H1)       f32
    w2_ref,     # (H1, H2)      f32
    b2_ref,     # (1, H2)       f32
    w3_ref,     # (H2, 1)       f32
    b3_ref,     # (1, 1)        f32
    out_ref,    # (TB, Dp)      f32
    gi_scr,     # (T, TB, 3*Dp) f32 scratch: hoisted X @ W_ih (+ folded biases)
    int_scr,    # (T, TB, Dp)   f32 scratch: masked GRU outputs (interests)
):
    T, TB, Dp = int_scr.shape
    H1 = wq_ref.shape[1]
    TTB = T * TB

    q = q_ref[...]                      # (TB, Dp)
    kl = kl_ref[...]                    # (TB, 1) int32
    whh = whh_ref[...]                  # (Dp, 3Dp)
    bhn = bhn_ref[...]                  # (1, Dp)

    # ---- Phase 0: hoisted input-side GRU matmul over all timesteps (one big MXU op)
    gi = jnp.dot(keys_ref[...].reshape(TTB, Dp), wih_ref[...],
                 preferred_element_type=jnp.float32) + bi_ref[...]
    gi_scr[...] = gi.reshape(T, TB, 3 * Dp)

    # ---- Phase 1: serial GRU recurrence — only h @ W_hh_fused per step
    def step(t, h):
        gi_t = gi_scr[t]                                        # (TB, 3Dp)
        gh = jnp.dot(h, whh, preferred_element_type=jnp.float32)
        r = jax.nn.sigmoid(gi_t[:, :Dp] + gh[:, :Dp])
        z = jax.nn.sigmoid(gi_t[:, Dp:2 * Dp] + gh[:, Dp:2 * Dp])
        n = jnp.tanh(gi_t[:, 2 * Dp:] + r * (gh[:, 2 * Dp:] + bhn))
        h_new = (1.0 - z) * n + z * h
        valid = t < kl                                          # (TB, 1) bool
        h_new = jnp.where(valid, h_new, h)                      # freeze past length
        int_scr[t] = jnp.where(valid, h_new, 0.0)               # padded output = 0
        return h_new

    h0 = jnp.zeros((TB, Dp), jnp.float32)
    lax.fori_loop(0, T, step, h0, unroll=True)

    # ---- Phase 2: DIN attention MLP + weighted sum, batched over all timesteps
    ints = int_scr[...]                                         # (T, TB, Dp)
    qterm = jnp.dot(q, wq_ref[...],
                    preferred_element_type=jnp.float32) + b1_ref[...]   # (TB, H1)
    i2 = ints.reshape(TTB, Dp)
    qi2 = (ints * q[None, :, :]).reshape(TTB, Dp)
    z1 = (jnp.dot(i2, wk_ref[...], preferred_element_type=jnp.float32)
          + jnp.dot(qi2, wp_ref[...], preferred_element_type=jnp.float32)
          ).reshape(T, TB, H1) + qterm[None, :, :]
    a1 = jax.nn.sigmoid(z1).reshape(TTB, H1)
    a2 = jax.nn.sigmoid(jnp.dot(a1, w2_ref[...],
                                preferred_element_type=jnp.float32) + b2_ref[...])
    score = (jnp.dot(a2, w3_ref[...],
                     preferred_element_type=jnp.float32) + b3_ref[...]
             ).reshape(T, TB, 1)
    tids = lax.broadcasted_iota(jnp.int32, (T, TB, 1), 0)
    score = jnp.where(tids < kl[None, :, :], score, 0.0)        # no softmax
    out_ref[...] = jnp.sum(score * ints, axis=0)                # (TB, Dp)


def interest_evolving(query, keys, keys_length, params):
    """query: (B, D) f32; keys: (B, T, D) f32; keys_length: (B,) int -> (B, D) f32."""
    B, D = query.shape
    T = keys.shape[1]
    H1 = params["att_w1"].shape[-1]
    H2 = params["att_w2"].shape[-1]
    f32 = jnp.float32

    # Lane-dense padding (exact: padded weight rows/cols and inputs are zero).
    Dp = _round_up(max(D, 128), 128)
    Bp8 = _round_up(B, 8)
    TB = min(Bp8, 64)          # batch tile (multiple of 8); capped for v7x 64 MiB VMEM
    Bp = _round_up(B, TB)

    def pad_axes(x, axes, target):
        pads = [(0, 0)] * x.ndim
        for a in axes:
            pads[a] = (0, target - x.shape[a])
        return jnp.pad(x.astype(f32), pads)

    # ---- fused / folded parameters (built once outside the kernel) ----
    w_ih = pad_axes(params["w_ih"], (1, 2), Dp)        # (3, Dp, Dp)
    w_hh = pad_axes(params["w_hh"], (1, 2), Dp)
    b_ih = pad_axes(params["b_ih"], (2,), Dp)          # (3, 1, Dp)
    b_hh = pad_axes(params["b_hh"], (2,), Dp)
    wih_f = jnp.concatenate([w_ih[0], w_ih[1], w_ih[2]], axis=1)            # (Dp, 3Dp)
    whh_f = jnp.concatenate([w_hh[0], w_hh[1], w_hh[2]], axis=1)            # (Dp, 3Dp)
    bi_f = jnp.concatenate([b_ih[0] + b_hh[0], b_ih[1] + b_hh[1], b_ih[2]], axis=1)
    bhn = b_hh[2]                                                            # (1, Dp)

    aw1 = pad_axes(params["att_w1"], (1,), Dp)         # (4, Dp, H1)
    wq = aw1[0] + aw1[2]
    wk = aw1[1] - aw1[2]
    wp = aw1[3]
    b1 = params["att_b1"].astype(f32)
    w2 = params["att_w2"].astype(f32)
    b2 = params["att_b2"].astype(f32)
    w3 = params["att_w3"].astype(f32)
    b3 = params["att_b3"].astype(f32)

    # ---- pad activations and go time-major; padded rows carry keys_length = 0 ----
    qp = jnp.pad(query.astype(f32), ((0, Bp - B), (0, Dp - D)))
    kp = jnp.pad(keys.astype(f32), ((0, Bp - B), (0, 0), (0, Dp - D)))
    keys_tm = jnp.transpose(kp, (1, 0, 2))                                   # (T, Bp, Dp)
    klp = jnp.pad(keys_length.astype(jnp.int32), ((0, Bp - B),)).reshape(Bp, 1)

    def rep(shape):                                   # replicated (untiled) weight block
        zeros = (0,) * len(shape)
        return pl.BlockSpec(shape, lambda b, _z=zeros: _z)

    grid_spec = pltpu.PrefetchScalarGridSpec(
        num_scalar_prefetch=0,
        grid=(Bp // TB,),
        in_specs=[
            pl.BlockSpec((TB, Dp), lambda b: (b, 0)),          # query
            pl.BlockSpec((T, TB, Dp), lambda b: (0, b, 0)),    # keys (time-major)
            pl.BlockSpec((TB, 1), lambda b: (b, 0)),           # keys_length
            rep((Dp, 3 * Dp)), rep((Dp, 3 * Dp)),              # W_ih, W_hh (fused)
            rep((1, 3 * Dp)), rep((1, Dp)),                    # biases
            rep((Dp, H1)), rep((Dp, H1)), rep((Dp, H1)),       # attention W1 folds
            rep((1, H1)), rep((H1, H2)), rep((1, H2)),
            rep((H2, 1)), rep((1, 1)),
        ],
        out_specs=pl.BlockSpec((TB, Dp), lambda b: (b, 0)),
        scratch_shapes=[
            pltpu.VMEM((T, TB, 3 * Dp), jnp.float32),          # hoisted X @ W_ih
            pltpu.VMEM((T, TB, Dp), jnp.float32),              # interests
        ],
    )

    out_p = pl.pallas_call(
        interest_evolving_kernel,
        out_shape=jax.ShapeDtypeStruct((Bp, Dp), jnp.float32),
        grid_spec=grid_spec,
        compiler_params=pltpu.CompilerParams(
            dimension_semantics=("parallel",)),
    )(qp, keys_tm, klp, wih_f, whh_f, bi_f, bhn,
      wq, wk, wp, b1, w2, b2, w3, b3)

    return out_p[:B, :D]


def reference(query, keys, keys_length, p):
    """Pure-JAX mirror of the PyTorch forward (for verification)."""
    B, T, D = keys.shape
    valid = jnp.arange(T)[None, :] < keys_length[:, None]     # (B, T)

    def gru_step(h, inp):
        x, v = inp                                            # (B, D), (B, 1)
        r = jax.nn.sigmoid(x @ p["w_ih"][0] + p["b_ih"][0] + h @ p["w_hh"][0] + p["b_hh"][0])
        z = jax.nn.sigmoid(x @ p["w_ih"][1] + p["b_ih"][1] + h @ p["w_hh"][1] + p["b_hh"][1])
        n = jnp.tanh(x @ p["w_ih"][2] + p["b_ih"][2] + r * (h @ p["w_hh"][2] + p["b_hh"][2]))
        h_new = (1.0 - z) * n + z * h
        h_new = jnp.where(v, h_new, h)
        return h_new, jnp.where(v, h_new, 0.0)

    xs = (jnp.transpose(keys, (1, 0, 2)), jnp.transpose(valid)[:, :, None])
    _, interests_tm = lax.scan(gru_step, jnp.zeros((B, D), jnp.float32), xs)
    interests = jnp.transpose(interests_tm, (1, 0, 2))        # (B, T, D)

    qe = jnp.broadcast_to(query[:, None, :], (B, T, D))
    z1 = (qe @ p["att_w1"][0] + interests @ p["att_w1"][1]
          + (qe - interests) @ p["att_w1"][2] + (qe * interests) @ p["att_w1"][3]
          + p["att_b1"])
    a1 = jax.nn.sigmoid(z1)
    a2 = jax.nn.sigmoid(a1 @ p["att_w2"] + p["att_b2"])
    score = a2 @ p["att_w3"] + p["att_b3"]                    # (B, T, 1)
    score = jnp.where(valid[:, :, None], score, 0.0)
    return jnp.sum(score * interests, axis=1)                 # (B, D)


def make_params(key, D, H1=64, H2=16, init_std=0.001):
    ks = jax.random.split(key, 8)
    bound = 1.0 / math.sqrt(D)
    f32 = jnp.float32
    return {
        # GRU (weights ~ N(0, init_std) as in the module; biases ~ default uniform)
        "w_ih": jax.random.normal(ks[0], (3, D, D), f32) * init_std,
        "w_hh": jax.random.normal(ks[1], (3, D, D), f32) * init_std,
        "b_ih": jax.random.uniform(ks[2], (3, 1, D), f32, -bound, bound),
        "b_hh": jax.random.uniform(ks[3], (3, 1, D), f32, -bound, bound),
        # Attention MLP: 4D -> H1 -> H2 -> 1 (sigmoid activations)
        "att_w1": jax.random.normal(ks[4], (4, D, H1), f32) * 0.05,
        "att_b1": jnp.zeros((1, H1), f32),
        "att_w2": jax.random.normal(ks[5], (H1, H2), f32) * 0.05,
        "att_b2": jnp.zeros((1, H2), f32),
        "att_w3": jax.random.normal(ks[6], (H2, 1), f32) * 0.05,
        "att_b3": jnp.zeros((1, 1), f32),
    }


if __name__ == "__main__":
    B, T, D = 4, 8, 32
    key = jax.random.PRNGKey(0)
    k_q, k_k, k_p = jax.random.split(key, 3)

    query = jax.random.normal(k_q, (B, D), jnp.float32)
    keys = jax.random.normal(k_k, (B, T, D), jnp.float32)
    keys_length = jnp.array([5, 8, 0, 3], dtype=jnp.int32)   # includes a zero-length row
    params = make_params(k_p, D)

    out = interest_evolving(query, keys, keys_length, params)
    out = jax.block_until_ready(out)

    ref = jax.block_until_ready(reference(query, keys, keys_length, params))
    np.testing.assert_allclose(np.asarray(out), np.asarray(ref), rtol=1e-4, atol=1e-5)
    # zero-length row must be exactly zero (zero_outputs semantics)
    assert np.allclose(np.asarray(out)[2], 0.0)

    print("KERNEL_OK")
</pallas_src>

<mosaic_0001>
module attributes {stable_mosaic.version = 11 : i64} {
  func.func @interest_evolving_kernel(%arg0: i32, %arg1: memref<8x128xf32, #tpu.memory_space<vmem>>, %arg2: memref<8x8x128xf32, #tpu.memory_space<vmem>>, %arg3: memref<8x1xi32, #tpu.memory_space<vmem>>, %arg4: memref<128x384xf32, #tpu.memory_space<vmem>>, %arg5: memref<128x384xf32, #tpu.memory_space<vmem>>, %arg6: memref<1x384xf32, #tpu.memory_space<vmem>>, %arg7: memref<1x128xf32, #tpu.memory_space<vmem>>, %arg8: memref<128x64xf32, #tpu.memory_space<vmem>>, %arg9: memref<128x64xf32, #tpu.memory_space<vmem>>, %arg10: memref<128x64xf32, #tpu.memory_space<vmem>>, %arg11: memref<1x64xf32, #tpu.memory_space<vmem>>, %arg12: memref<64x16xf32, #tpu.memory_space<vmem>>, %arg13: memref<1x16xf32, #tpu.memory_space<vmem>>, %arg14: memref<16x1xf32, #tpu.memory_space<vmem>>, %arg15: memref<1x1xf32, #tpu.memory_space<vmem>>, %arg16: memref<8x128xf32, #tpu.memory_space<vmem>>, %arg17: memref<8x8x384xf32, #tpu.memory_space<vmem>>, %arg18: memref<8x8x128xf32, #tpu.memory_space<vmem>>) attributes {dimension_semantics = [#tpu.dimension_semantics<parallel>], iteration_bounds = array<i64: 1>, scalar_prefetch = 0 : i64, scratch_operands = 2 : i64, tpu.core_type = #tpu.core_type<tc>, window_params = [{transform_indices = @transform_0, window_bounds = array<i64: 8, 128>}, {transform_indices = @transform_1, window_bounds = array<i64: 8, 8, 128>}, {transform_indices = @transform_2, window_bounds = array<i64: 8, 1>}, {pipeline_mode = #tpu.pipeline_mode<synchronous>, transform_indices = @transform_3, window_bounds = array<i64: 128, 384>}, {pipeline_mode = #tpu.pipeline_mode<synchronous>, transform_indices = @transform_4, window_bounds = array<i64: 128, 384>}, {pipeline_mode = #tpu.pipeline_mode<synchronous>, transform_indices = @transform_5, window_bounds = array<i64: 1, 384>}, {pipeline_mode = #tpu.pipeline_mode<synchronous>, transform_indices = @transform_6, window_bounds = array<i64: 1, 128>}, {pipeline_mode = #tpu.pipeline_mode<synchronous>, transform_indices = @transform_7, window_bounds = array<i64: 128, 64>}, {pipeline_mode = #tpu.pipeline_mode<synchronous>, transform_indices = @transform_8, window_bounds = array<i64: 128, 64>}, {pipeline_mode = #tpu.pipeline_mode<synchronous>, transform_indices = @transform_9, window_bounds = array<i64: 128, 64>}, {pipeline_mode = #tpu.pipeline_mode<synchronous>, transform_indices = @transform_10, window_bounds = array<i64: 1, 64>}, {pipeline_mode = #tpu.pipeline_mode<synchronous>, transform_indices = @transform_11, window_bounds = array<i64: 64, 16>}, {pipeline_mode = #tpu.pipeline_mode<synchronous>, transform_indices = @transform_12, window_bounds = array<i64: 1, 16>}, {pipeline_mode = #tpu.pipeline_mode<synchronous>, transform_indices = @transform_13, window_bounds = array<i64: 16, 1>}, {pipeline_mode = #tpu.pipeline_mode<synchronous>, transform_indices = @transform_14, window_bounds = array<i64: 1, 1>}, {transform_indices = @transform_15, window_bounds = array<i64: 8, 128>}]} {
    %c0 = arith.constant 0 : index
    %c0_0 = arith.constant 0 : index
    %0 = vector.load %arg1[%c0, %c0_0] : memref<8x128xf32, #tpu.memory_space<vmem>>, vector<8x128xf32>
    %c0_1 = arith.constant 0 : index
    %c0_2 = arith.constant 0 : index
    %1 = vector.load %arg3[%c0_1, %c0_2] : memref<8x1xi32, #tpu.memory_space<vmem>>, vector<8x1xi32>
    %c0_3 = arith.constant 0 : index
    %c0_4 = arith.constant 0 : index
    %2 = vector.load %arg5[%c0_3, %c0_4] : memref<128x384xf32, #tpu.memory_space<vmem>>, vector<128x384xf32>
    %c0_5 = arith.constant 0 : index
    %c0_6 = arith.constant 0 : index
    %3 = vector.load %arg7[%c0_5, %c0_6] : memref<1x128xf32, #tpu.memory_space<vmem>>, vector<1x128xf32>
    %c0_7 = arith.constant 0 : index
    %c0_8 = arith.constant 0 : index
    %c0_9 = arith.constant 0 : index
    %4 = vector.load %arg2[%c0_7, %c0_8, %c0_9] : memref<8x8x128xf32, #tpu.memory_space<vmem>>, vector<8x8x128xf32>
    %5 = vector.shape_cast %4 : vector<8x8x128xf32> to vector<64x128xf32>
    %c0_10 = arith.constant 0 : index
    %c0_11 = arith.constant 0 : index
    %6 = vector.load %arg4[%c0_10, %c0_11] : memref<128x384xf32, #tpu.memory_space<vmem>>, vector<128x384xf32>
    %cst = arith.constant dense<0.000000e+00> : vector<64x384xf32>
    %7 = tpu.matmul %5, %6, %cst {dimension_numbers = #tpu.dot_dimension_numbers<[1], [0], [0], [1], [0, 0, 1, 1], [], []>} : vector<64x128xf32>, vector<128x384xf32>, vector<64x384xf32> -> vector<64x384xf32>
    %c0_12 = arith.constant 0 : index
    %c0_13 = arith.constant 0 : index
    %8 = vector.load %arg6[%c0_12, %c0_13] : memref<1x384xf32, #tpu.memory_space<vmem>>, vector<1x384xf32>
    %9 = vector.broadcast %8 : vector<1x384xf32> to vector<64x384xf32>
    %10 = arith.addf %7, %9 : vector<64x384xf32>
    %11 = vector.shape_cast %10 : vector<64x384xf32> to vector<8x8x384xf32>
    %c0_14 = arith.constant 0 : index
    %c0_15 = arith.constant 0 : index
    %c0_16 = arith.constant 0 : index
    %12 = vector.load %arg17[%c0_14, %c0_15, %c0_16] : memref<8x8x384xf32, #tpu.memory_space<vmem>>, vector<8x8x384xf32>
    tpu.vector_store %arg17[%c0_14, %c0_15, %c0_16], %11 {strides = array<i32>} : memref<8x8x384xf32, #tpu.memory_space<vmem>>, vector<8x8x384xf32>,
    %cst_17 = arith.constant 0.000000e+00 : f32
    %13 = vector.broadcast %cst_17 : f32 to vector<8x128xf32>
    %c0_i32 = arith.constant 0 : i32
    %14 = arith.index_cast %c0_i32 : i32 to index
    %c0_18 = arith.constant 0 : index
    %c0_19 = arith.constant 0 : index
    %15 = vector.load %arg17[%14, %c0_18, %c0_19] : memref<8x8x384xf32, #tpu.memory_space<vmem>>, vector<1x8x384xf32>
    %16 = vector.shape_cast %15 : vector<1x8x384xf32> to vector<8x384xf32>
    %cst_20 = arith.constant dense<0.000000e+00> : vector<8x384xf32>
    %17 = tpu.matmul %13, %2, %cst_20 {dimension_numbers = #tpu.dot_dimension_numbers<[1], [0], [0], [1], [0, 0, 1, 1], [], []>} : vector<8x128xf32>, vector<128x384xf32>, vector<8x384xf32> -> vector<8x384xf32>
    %18 = vector.extract_strided_slice %16 {offsets = [0, 0], sizes = [8, 128], strides = [1, 1]} : vector<8x384xf32> to vector<8x128xf32>
    %19 = vector.extract_strided_slice %17 {offsets = [0, 0], sizes = [8, 128], strides = [1, 1]} : vector<8x384xf32> to vector<8x128xf32>
    %20 = arith.addf %18, %19 : vector<8x128xf32>
    %21 = arith.negf %20 : vector<8x128xf32>
    %22 = math.exp %21 : vector<8x128xf32>
    %cst_21 = arith.constant 1.000000e+00 : f32
    %23 = vector.broadcast %cst_21 : f32 to vector<8x128xf32>
    %24 = arith.addf %23, %22 : vector<8x128xf32>
    %25 = arith.divf %23, %24 : vector<8x128xf32>
    %26 = vector.extract_strided_slice %16 {offsets = [0, 128], sizes = [8, 128], strides = [1, 1]} : vector<8x384xf32> to vector<8x128xf32>
    %27 = vector.extract_strided_slice %17 {offsets = [0, 128], sizes = [8, 128], strides = [1, 1]} : vector<8x384xf32> to vector<8x128xf32>
    %28 = arith.addf %26, %27 : vector<8x128xf32>
    %29 = arith.negf %28 : vector<8x128xf32>
    %30 = math.exp %29 : vector<8x128xf32>
    %cst_22 = arith.constant 1.000000e+00 : f32
    %31 = vector.broadcast %cst_22 : f32 to vector<8x128xf32>
    %32 = arith.addf %31, %30 : vector<8x128xf32>
    %33 = arith.divf %31, %32 : vector<8x128xf32>
    %34 = vector.extract_strided_slice %16 {offsets = [0, 256], sizes = [8, 128], strides = [1, 1]} : vector<8x384xf32> to vector<8x128xf32>
    %35 = vector.extract_strided_slice %17 {offsets = [0, 256], sizes = [8, 128], strides = [1, 1]} : vector<8x384xf32> to vector<8x128xf32>
    %36 = vector.broadcast %3 : vector<1x128xf32> to vector<8x128xf32>
    %37 = arith.addf %35, %36 : vector<8x128xf32>
    %38 = arith.mulf %25, %37 : vector<8x128xf32>
    %39 = arith.addf %34, %38 : vector<8x128xf32>
    %40 = math.tanh %39 : vector<8x128xf32>
    %cst_23 = arith.constant 1.000000e+00 : f32
    %41 = vector.broadcast %cst_23 : f32 to vector<8x128xf32>
    %42 = arith.subf %41, %33 : vector<8x128xf32>
    %43 = arith.mulf %42, %40 : vector<8x128xf32>
    %44 = arith.mulf %33, %13 : vector<8x128xf32>
    %45 = arith.addf %43, %44 : vector<8x128xf32>
    %46 = vector.broadcast %c0_i32 : i32 to vector<8x1xi32>
    %47 = arith.cmpi slt, %46, %1 : vector<8x1xi32>
    %48 = vector.shape_cast %47 : vector<8x1xi1> to vector<8x1xi1>
    %49 = vector.broadcast %48 : vector<8x1xi1> to vector<8x128xi1>
    %50 = arith.select %49, %45, %13 : vector<8x128xi1>, vector<8x128xf32>
    %cst_24 = arith.constant 0.000000e+00 : f32
    %51 = vector.shape_cast %47 : vector<8x1xi1> to vector<8x1xi1>
    %52 = vector.broadcast %51 : vector<8x1xi1> to vector<8x128xi1>
    %53 = vector.broadcast %cst_24 : f32 to vector<8x128xf32>
    %54 = arith.select %52, %50, %53 : vector<8x128xi1>, vector<8x128xf32>
    %55 = arith.index_cast %c0_i32 : i32 to index
    %c0_25 = arith.constant 0 : index
    %c0_26 = arith.constant 0 : index
    %56 = vector.load %arg18[%55, %c0_25, %c0_26] : memref<8x8x128xf32, #tpu.memory_space<vmem>>, vector<1x8x128xf32>
    %57 = vector.shape_cast %56 : vector<1x8x128xf32> to vector<8x128xf32>
    %58 = vector.shape_cast %54 : vector<8x128xf32> to vector<1x8x128xf32>
    tpu.vector_store %arg18[%55, %c0_25, %c0_26], %58 {strides = array<i32>} : memref<8x8x128xf32, #tpu.memory_space<vmem>>, vector<1x8x128xf32>,
    %c1_i32 = arith.constant 1 : i32
    %59 = arith.index_cast %c1_i32 : i32 to index
    %c0_27 = arith.constant 0 : index
    %c0_28 = arith.constant 0 : index
    %60 = vector.load %arg17[%59, %c0_27, %c0_28] : memref<8x8x384xf32, #tpu.memory_space<vmem>>, vector<1x8x384xf32>
    %61 = vector.shape_cast %60 : vector<1x8x384xf32> to vector<8x384xf32>
    %cst_29 = arith.constant dense<0.000000e+00> : vector<8x384xf32>
    %62 = tpu.matmul %50, %2, %cst_29 {dimension_numbers = #tpu.dot_dimension_numbers<[1], [0], [0], [1], [0, 0, 1, 1], [], []>} : vector<8x128xf32>, vector<128x384xf32>, vector<8x384xf32> -> vector<8x384xf32>
    %63 = vector.extract_strided_slice %61 {offsets = [0, 0], sizes = [8, 128], strides = [1, 1]} : vector<8x384xf32> to vector<8x128xf32>
    %64 = vector.extract_strided_slice %62 {offsets = [0, 0], sizes = [8, 128], strides = [1, 1]} : vector<8x384xf32> to vector<8x128xf32>
    %65 = arith.addf %63, %64 : vector<8x128xf32>
    %66 = arith.negf %65 : vector<8x128xf32>
    %67 = math.exp %66 : vector<8x128xf32>
    %cst_30 = arith.constant 1.000000e+00 : f32
    %68 = vector.broadcast %cst_30 : f32 to vector<8x128xf32>
    %69 = arith.addf %68, %67 : vector<8x128xf32>
    %70 = arith.divf %68, %69 : vector<8x128xf32>
    %71 = vector.extract_strided_slice %61 {offsets = [0, 128], sizes = [8, 128], strides = [1, 1]} : vector<8x384xf32> to vector<8x128xf32>
    %72 = vector.extract_strided_slice %62 {offsets = [0, 128], sizes = [8, 128], strides = [1, 1]} : vector<8x384xf32> to vector<8x128xf32>
    %73 = arith.addf %71, %72 : vector<8x128xf32>
    %74 = arith.negf %73 : vector<8x128xf32>
    %75 = math.exp %74 : vector<8x128xf32>
    %cst_31 = arith.constant 1.000000e+00 : f32
    %76 = vector.broadcast %cst_31 : f32 to vector<8x128xf32>
    %77 = arith.addf %76, %75 : vector<8x128xf32>
    %78 = arith.divf %76, %77 : vector<8x128xf32>
    %79 = vector.extract_strided_slice %61 {offsets = [0, 256], sizes = [8, 128], strides = [1, 1]} : vector<8x384xf32> to vector<8x128xf32>
    %80 = vector.extract_strided_slice %62 {offsets = [0, 256], sizes = [8, 128], strides = [1, 1]} : vector<8x384xf32> to vector<8x128xf32>
    %81 = vector.broadcast %3 : vector<1x128xf32> to vector<8x128xf32>
    %82 = arith.addf %80, %81 : vector<8x128xf32>
    %83 = arith.mulf %70, %82 : vector<8x128xf32>
    %84 = arith.addf %79, %83 : vector<8x128xf32>
    %85 = math.tanh %84 : vector<8x128xf32>
    %cst_32 = arith.constant 1.000000e+00 : f32
    %86 = vector.broadcast %cst_32 : f32 to vector<8x128xf32>
    %87 = arith.subf %86, %78 : vector<8x128xf32>
    %88 = arith.mulf %87, %85 : vector<8x128xf32>
    %89 = arith.mulf %78, %50 : vector<8x128xf32>
    %90 = arith.addf %88, %89 : vector<8x128xf32>
    %91 = vector.broadcast %c1_i32 : i32 to vector<8x1xi32>
    %92 = arith.cmpi slt, %91, %1 : vector<8x1xi32>
    %93 = vector.shape_cast %92 : vector<8x1xi1> to vector<8x1xi1>
    %94 = vector.broadcast %93 : vector<8x1xi1> to vector<8x128xi1>
    %95 = arith.select %94, %90, %50 : vector<8x128xi1>, vector<8x128xf32>
    %cst_33 = arith.constant 0.000000e+00 : f32
    %96 = vector.shape_cast %92 : vector<8x1xi1> to vector<8x1xi1>
    %97 = vector.broadcast %96 : vector<8x1xi1> to vector<8x128xi1>
    %98 = vector.broadcast %cst_33 : f32 to vector<8x128xf32>
    %99 = arith.select %97, %95, %98 : vector<8x128xi1>, vector<8x128xf32>
    %100 = arith.index_cast %c1_i32 : i32 to index
    %c0_34 = arith.constant 0 : index
    %c0_35 = arith.constant 0 : index
    %101 = vector.load %arg18[%100, %c0_34, %c0_35] : memref<8x8x128xf32, #tpu.memory_space<vmem>>, vector<1x8x128xf32>
    %102 = vector.shape_cast %101 : vector<1x8x128xf32> to vector<8x128xf32>
    %103 = vector.shape_cast %99 : vector<8x128xf32> to vector<1x8x128xf32>
    tpu.vector_store %arg18[%100, %c0_34, %c0_35], %103 {strides = array<i32>} : memref<8x8x128xf32, #tpu.memory_space<vmem>>, vector<1x8x128xf32>,
    %c2_i32 = arith.constant 2 : i32
    %104 = arith.index_cast %c2_i32 : i32 to index
    %c0_36 = arith.constant 0 : index
    %c0_37 = arith.constant 0 : index
    %105 = vector.load %arg17[%104, %c0_36, %c0_37] : memref<8x8x384xf32, #tpu.memory_space<vmem>>, vector<1x8x384xf32>
    %106 = vector.shape_cast %105 : vector<1x8x384xf32> to vector<8x384xf32>
    %cst_38 = arith.constant dense<0.000000e+00> : vector<8x384xf32>
    %107 = tpu.matmul %95, %2, %cst_38 {dimension_numbers = #tpu.dot_dimension_numbers<[1], [0], [0], [1], [0, 0, 1, 1], [], []>} : vector<8x128xf32>, vector<128x384xf32>, vector<8x384xf32> -> vector<8x384xf32>
    %108 = vector.extract_strided_slice %106 {offsets = [0, 0], sizes = [8, 128], strides = [1, 1]} : vector<8x384xf32> to vector<8x128xf32>
    %109 = vector.extract_strided_slice %107 {offsets = [0, 0], sizes = [8, 128], strides = [1, 1]} : vector<8x384xf32> to vector<8x128xf32>
    %110 = arith.addf %108, %109 : vector<8x128xf32>
    %111 = arith.negf %110 : vector<8x128xf32>
    %112 = math.exp %111 : vector<8x128xf32>
    %cst_39 = arith.constant 1.000000e+00 : f32
    %113 = vector.broadcast %cst_39 : f32 to vector<8x128xf32>
    %114 = arith.addf %113, %112 : vector<8x128xf32>
    %115 = arith.divf %113, %114 : vector<8x128xf32>
    %116 = vector.extract_strided_slice %106 {offsets = [0, 128], sizes = [8, 128], strides = [1, 1]} : vector<8x384xf32> to vector<8x128xf32>
    %117 = vector.extract_strided_slice %107 {offsets = [0, 128], sizes = [8, 128], strides = [1, 1]} : vector<8x384xf32> to vector<8x128xf32>
    %118 = arith.addf %116, %117 : vector<8x128xf32>
    %119 = arith.negf %118 : vector<8x128xf32>
    %120 = math.exp %119 : vector<8x128xf32>
    %cst_40 = arith.constant 1.000000e+00 : f32
    %121 = vector.broadcast %cst_40 : f32 to vector<8x128xf32>
    %122 = arith.addf %121, %120 : vector<8x128xf32>
    %123 = arith.divf %121, %122 : vector<8x128xf32>
    %124 = vector.extract_strided_slice %106 {offsets = [0, 256], sizes = [8, 128], strides = [1, 1]} : vector<8x384xf32> to vector<8x128xf32>
    %125 = vector.extract_strided_slice %107 {offsets = [0, 256], sizes = [8, 128], strides = [1, 1]} : vector<8x384xf32> to vector<8x128xf32>
    %126 = vector.broadcast %3 : vector<1x128xf32> to vector<8x128xf32>
    %127 = arith.addf %125, %126 : vector<8x128xf32>
    %128 = arith.mulf %115, %127 : vector<8x128xf32>
    %129 = arith.addf %124, %128 : vector<8x128xf32>
    %130 = math.tanh %129 : vector<8x128xf32>
    %cst_41 = arith.constant 1.000000e+00 : f32
    %131 = vector.broadcast %cst_41 : f32 to vector<8x128xf32>
    %132 = arith.subf %131, %123 : vector<8x128xf32>
    %133 = arith.mulf %132, %130 : vector<8x128xf32>
    %134 = arith.mulf %123, %95 : vector<8x128xf32>
    %135 = arith.addf %133, %134 : vector<8x128xf32>
    %136 = vector.broadcast %c2_i32 : i32 to vector<8x1xi32>
    %137 = arith.cmpi slt, %136, %1 : vector<8x1xi32>
    %138 = vector.shape_cast %137 : vector<8x1xi1> to vector<8x1xi1>
    %139 = vector.broadcast %138 : vector<8x1xi1> to vector<8x128xi1>
    %140 = arith.select %139, %135, %95 : vector<8x128xi1>, vector<8x128xf32>
    %cst_42 = arith.constant 0.000000e+00 : f32
    %141 = vector.shape_cast %137 : vector<8x1xi1> to vector<8x1xi1>
    %142 = vector.broadcast %141 : vector<8x1xi1> to vector<8x128xi1>
    %143 = vector.broadcast %cst_42 : f32 to vector<8x128xf32>
    %144 = arith.select %142, %140, %143 : vector<8x128xi1>, vector<8x128xf32>
    %145 = arith.index_cast %c2_i32 : i32 to index
    %c0_43 = arith.constant 0 : index
    %c0_44 = arith.constant 0 : index
    %146 = vector.load %arg18[%145, %c0_43, %c0_44] : memref<8x8x128xf32, #tpu.memory_space<vmem>>, vector<1x8x128xf32>
    %147 = vector.shape_cast %146 : vector<1x8x128xf32> to vector<8x128xf32>
    %148 = vector.shape_cast %144 : vector<8x128xf32> to vector<1x8x128xf32>
    tpu.vector_store %arg18[%145, %c0_43, %c0_44], %148 {strides = array<i32>} : memref<8x8x128xf32, #tpu.memory_space<vmem>>, vector<1x8x128xf32>,
    %c3_i32 = arith.constant 3 : i32
    %149 = arith.index_cast %c3_i32 : i32 to index
    %c0_45 = arith.constant 0 : index
    %c0_46 = arith.constant 0 : index
    %150 = vector.load %arg17[%149, %c0_45, %c0_46] : memref<8x8x384xf32, #tpu.memory_space<vmem>>, vector<1x8x384xf32>
    %151 = vector.shape_cast %150 : vector<1x8x384xf32> to vector<8x384xf32>
    %cst_47 = arith.constant dense<0.000000e+00> : vector<8x384xf32>
    %152 = tpu.matmul %140, %2, %cst_47 {dimension_numbers = #tpu.dot_dimension_numbers<[1], [0], [0], [1], [0, 0, 1, 1], [], []>} : vector<8x128xf32>, vector<128x384xf32>, vector<8x384xf32> -> vector<8x384xf32>
    %153 = vector.extract_strided_slice %151 {offsets = [0, 0], sizes = [8, 128], strides = [1, 1]} : vector<8x384xf32> to vector<8x128xf32>
    %154 = vector.extract_strided_slice %152 {offsets = [0, 0], sizes = [8, 128], strides = [1, 1]} : vector<8x384xf32> to vector<8x128xf32>
    %155 = arith.addf %153, %154 : vector<8x128xf32>
    %156 = arith.negf %155 : vector<8x128xf32>
    %157 = math.exp %156 : vector<8x128xf32>
    %cst_48 = arith.constant 1.000000e+00 : f32
    %158 = vector.broadcast %cst_48 : f32 to vector<8x128xf32>
    %159 = arith.addf %158, %157 : vector<8x128xf32>
    %160 = arith.divf %158, %159 : vector<8x128xf32>
    %161 = vector.extract_strided_slice %151 {offsets = [0, 128], sizes = [8, 128], strides = [1, 1]} : vector<8x384xf32> to vector<8x128xf32>
    %162 = vector.extract_strided_slice %152 {offsets = [0, 128], sizes = [8, 128], strides = [1, 1]} : vector<8x384xf32> to vector<8x128xf32>
    %163 = arith.addf %161, %162 : vector<8x128xf32>
    %164 = arith.negf %163 : vector<8x128xf32>
    %165 = math.exp %164 : vector<8x128xf32>
    %cst_49 = arith.constant 1.000000e+00 : f32
    %166 = vector.broadcast %cst_49 : f32 to vector<8x128xf32>
    %167 = arith.addf %166, %165 : vector<8x128xf32>
    %168 = arith.divf %166, %167 : vector<8x128xf32>
    %169 = vector.extract_strided_slice %151 {offsets = [0, 256], sizes = [8, 128], strides = [1, 1]} : vector<8x384xf32> to vector<8x128xf32>
    %170 = vector.extract_strided_slice %152 {offsets = [0, 256], sizes = [8, 128], strides = [1, 1]} : vector<8x384xf32> to vector<8x128xf32>
    %171 = vector.broadcast %3 : vector<1x128xf32> to vector<8x128xf32>
    %172 = arith.addf %170, %171 : vector<8x128xf32>
    %173 = arith.mulf %160, %172 : vector<8x128xf32>
    %174 = arith.addf %169, %173 : vector<8x128xf32>
    %175 = math.tanh %174 : vector<8x128xf32>
    %cst_50 = arith.constant 1.000000e+00 : f32
    %176 = vector.broadcast %cst_50 : f32 to vector<8x128xf32>
    %177 = arith.subf %176, %168 : vector<8x128xf32>
    %178 = arith.mulf %177, %175 : vector<8x128xf32>
    %179 = arith.mulf %168, %140 : vector<8x128xf32>
    %180 = arith.addf %178, %179 : vector<8x128xf32>
    %181 = vector.broadcast %c3_i32 : i32 to vector<8x1xi32>
    %182 = arith.cmpi slt, %181, %1 : vector<8x1xi32>
    %183 = vector.shape_cast %182 : vector<8x1xi1> to vector<8x1xi1>
    %184 = vector.broadcast %183 : vector<8x1xi1> to vector<8x128xi1>
    %185 = arith.select %184, %180, %140 : vector<8x128xi1>, vector<8x128xf32>
    %cst_51 = arith.constant 0.000000e+00 : f32
    %186 = vector.shape_cast %182 : vector<8x1xi1> to vector<8x1xi1>
    %187 = vector.broadcast %186 : vector<8x1xi1> to vector<8x128xi1>
    %188 = vector.broadcast %cst_51 : f32 to vector<8x128xf32>
    %189 = arith.select %187, %185, %188 : vector<8x128xi1>, vector<8x128xf32>
    %190 = arith.index_cast %c3_i32 : i32 to index
    %c0_52 = arith.constant 0 : index
    %c0_53 = arith.constant 0 : index
    %191 = vector.load %arg18[%190, %c0_52, %c0_53] : memref<8x8x128xf32, #tpu.memory_space<vmem>>, vector<1x8x128xf32>
    %192 = vector.shape_cast %191 : vector<1x8x128xf32> to vector<8x128xf32>
    %193 = vector.shape_cast %189 : vector<8x128xf32> to vector<1x8x128xf32>
    tpu.vector_store %arg18[%190, %c0_52, %c0_53], %193 {strides = array<i32>} : memref<8x8x128xf32, #tpu.memory_space<vmem>>, vector<1x8x128xf32>,
    %c4_i32 = arith.constant 4 : i32
    %194 = arith.index_cast %c4_i32 : i32 to index
    %c0_54 = arith.constant 0 : index
    %c0_55 = arith.constant 0 : index
    %195 = vector.load %arg17[%194, %c0_54, %c0_55] : memref<8x8x384xf32, #tpu.memory_space<vmem>>, vector<1x8x384xf32>
    %196 = vector.shape_cast %195 : vector<1x8x384xf32> to vector<8x384xf32>
    %cst_56 = arith.constant dense<0.000000e+00> : vector<8x384xf32>
    %197 = tpu.matmul %185, %2, %cst_56 {dimension_numbers = #tpu.dot_dimension_numbers<[1], [0], [0], [1], [0, 0, 1, 1], [], []>} : vector<8x128xf32>, vector<128x384xf32>, vector<8x384xf32> -> vector<8x384xf32>
    %198 = vector.extract_strided_slice %196 {offsets = [0, 0], sizes = [8, 128], strides = [1, 1]} : vector<8x384xf32> to vector<8x128xf32>
    %199 = vector.extract_strided_slice %197 {offsets = [0, 0], sizes = [8, 128], strides = [1, 1]} : vector<8x384xf32> to vector<8x128xf32>
    %200 = arith.addf %198, %199 : vector<8x128xf32>
    %201 = arith.negf %200 : vector<8x128xf32>
    %202 = math.exp %201 : vector<8x128xf32>
    %cst_57 = arith.constant 1.000000e+00 : f32
    %203 = vector.broadcast %cst_57 : f32 to vector<8x128xf32>
    %204 = arith.addf %203, %202 : vector<8x128xf32>
    %205 = arith.divf %203, %204 : vector<8x128xf32>
    %206 = vector.extract_strided_slice %196 {offsets = [0, 128], sizes = [8, 128], strides = [1, 1]} : vector<8x384xf32> to vector<8x128xf32>
    %207 = vector.extract_strided_slice %197 {offsets = [0, 128], sizes = [8, 128], strides = [1, 1]} : vector<8x384xf32> to vector<8x128xf32>
    %208 = arith.addf %206, %207 : vector<8x128xf32>
    %209 = arith.negf %208 : vector<8x128xf32>
    %210 = math.exp %209 : vector<8x128xf32>
    %cst_58 = arith.constant 1.000000e+00 : f32
    %211 = vector.broadcast %cst_58 : f32 to vector<8x128xf32>
    %212 = arith.addf %211, %210 : vector<8x128xf32>
    %213 = arith.divf %211, %212 : vector<8x128xf32>
    %214 = vector.extract_strided_slice %196 {offsets = [0, 256], sizes = [8, 128], strides = [1, 1]} : vector<8x384xf32> to vector<8x128xf32>
    %215 = vector.extract_strided_slice %197 {offsets = [0, 256], sizes = [8, 128], strides = [1, 1]} : vector<8x384xf32> to vector<8x128xf32>
    %216 = vector.broadcast %3 : vector<1x128xf32> to vector<8x128xf32>
    %217 = arith.addf %215, %216 : vector<8x128xf32>
    %218 = arith.mulf %205, %217 : vector<8x128xf32>
    %219 = arith.addf %214, %218 : vector<8x128xf32>
    %220 = math.tanh %219 : vector<8x128xf32>
    %cst_59 = arith.constant 1.000000e+00 : f32
    %221 = vector.broadcast %cst_59 : f32 to vector<8x128xf32>
    %222 = arith.subf %221, %213 : vector<8x128xf32>
    %223 = arith.mulf %222, %220 : vector<8x128xf32>
    %224 = arith.mulf %213, %185 : vector<8x128xf32>
    %225 = arith.addf %223, %224 : vector<8x128xf32>
    %226 = vector.broadcast %c4_i32 : i32 to vector<8x1xi32>
    %227 = arith.cmpi slt, %226, %1 : vector<8x1xi32>
    %228 = vector.shape_cast %227 : vector<8x1xi1> to vector<8x1xi1>
    %229 = vector.broadcast %228 : vector<8x1xi1> to vector<8x128xi1>
    %230 = arith.select %229, %225, %185 : vector<8x128xi1>, vector<8x128xf32>
    %cst_60 = arith.constant 0.000000e+00 : f32
    %231 = vector.shape_cast %227 : vector<8x1xi1> to vector<8x1xi1>
    %232 = vector.broadcast %231 : vector<8x1xi1> to vector<8x128xi1>
    %233 = vector.broadcast %cst_60 : f32 to vector<8x128xf32>
    %234 = arith.select %232, %230, %233 : vector<8x128xi1>, vector<8x128xf32>
    %235 = arith.index_cast %c4_i32 : i32 to index
    %c0_61 = arith.constant 0 : index
    %c0_62 = arith.constant 0 : index
    %236 = vector.load %arg18[%235, %c0_61, %c0_62] : memref<8x8x128xf32, #tpu.memory_space<vmem>>, vector<1x8x128xf32>
    %237 = vector.shape_cast %236 : vector<1x8x128xf32> to vector<8x128xf32>
    %238 = vector.shape_cast %234 : vector<8x128xf32> to vector<1x8x128xf32>
    tpu.vector_store %arg18[%235, %c0_61, %c0_62], %238 {strides = array<i32>} : memref<8x8x128xf32, #tpu.memory_space<vmem>>, vector<1x8x128xf32>,
    %c5_i32 = arith.constant 5 : i32
    %239 = arith.index_cast %c5_i32 : i32 to index
    %c0_63 = arith.constant 0 : index
    %c0_64 = arith.constant 0 : index
    %240 = vector.load %arg17[%239, %c0_63, %c0_64] : memref<8x8x384xf32, #tpu.memory_space<vmem>>, vector<1x8x384xf32>
    %241 = vector.shape_cast %240 : vector<1x8x384xf32> to vector<8x384xf32>
    %cst_65 = arith.constant dense<0.000000e+00> : vector<8x384xf32>
    %242 = tpu.matmul %230, %2, %cst_65 {dimension_numbers = #tpu.dot_dimension_numbers<[1], [0], [0], [1], [0, 0, 1, 1], [], []>} : vector<8x128xf32>, vector<128x384xf32>, vector<8x384xf32> -> vector<8x384xf32>
    %243 = vector.extract_strided_slice %241 {offsets = [0, 0], sizes = [8, 128], strides = [1, 1]} : vector<8x384xf32> to vector<8x128xf32>
    %244 = vector.extract_strided_slice %242 {offsets = [0, 0], sizes = [8, 128], strides = [1, 1]} : vector<8x384xf32> to vector<8x128xf32>
    %245 = arith.addf %243, %244 : vector<8x128xf32>
    %246 = arith.negf %245 : vector<8x128xf32>
    %247 = math.exp %246 : vector<8x128xf32>
    %cst_66 = arith.constant 1.000000e+00 : f32
    %248 = vector.broadcast %cst_66 : f32 to vector<8x128xf32>
    %249 = arith.addf %248, %247 : vector<8x128xf32>
    %250 = arith.divf %248, %249 : vector<8x128xf32>
    %251 = vector.extract_strided_slice %241 {offsets = [0, 128], sizes = [8, 128], strides = [1, 1]} : vector<8x384xf32> to vector<8x128xf32>
    %252 = vector.extract_strided_slice %242 {offsets = [0, 128], sizes = [8, 128], strides = [1, 1]} : vector<8x384xf32> to vector<8x128xf32>
    %253 = arith.addf %251, %252 : vector<8x128xf32>
    %254 = arith.negf %253 : vector<8x128xf32>
    %255 = math.exp %254 : vector<8x128xf32>
    %cst_67 = arith.constant 1.000000e+00 : f32
    %256 = vector.broadcast %cst_67 : f32 to vector<8x128xf32>
    %257 = arith.addf %256, %255 : vector<8x128xf32>
    %258 = arith.divf %256, %257 : vector<8x128xf32>
    %259 = vector.extract_strided_slice %241 {offsets = [0, 256], sizes = [8, 128], strides = [1, 1]} : vector<8x384xf32> to vector<8x128xf32>
    %260 = vector.extract_strided_slice %242 {offsets = [0, 256], sizes = [8, 128], strides = [1, 1]} : vector<8x384xf32> to vector<8x128xf32>
    %261 = vector.broadcast %3 : vector<1x128xf32> to vector<8x128xf32>
    %262 = arith.addf %260, %261 : vector<8x128xf32>
    %263 = arith.mulf %250, %262 : vector<8x128xf32>
    %264 = arith.addf %259, %263 : vector<8x128xf32>
    %265 = math.tanh %264 : vector<8x128xf32>
    %cst_68 = arith.constant 1.000000e+00 : f32
    %266 = vector.broadcast %cst_68 : f32 to vector<8x128xf32>
    %267 = arith.subf %266, %258 : vector<8x128xf32>
    %268 = arith.mulf %267, %265 : vector<8x128xf32>
    %269 = arith.mulf %258, %230 : vector<8x128xf32>
    %270 = arith.addf %268, %269 : vector<8x128xf32>
    %271 = vector.broadcast %c5_i32 : i32 to vector<8x1xi32>
    %272 = arith.cmpi slt, %271, %1 : vector<8x1xi32>
    %273 = vector.shape_cast %272 : vector<8x1xi1> to vector<8x1xi1>
    %274 = vector.broadcast %273 : vector<8x1xi1> to vector<8x128xi1>
    %275 = arith.select %274, %270, %230 : vector<8x128xi1>, vector<8x128xf32>
    %cst_69 = arith.constant 0.000000e+00 : f32
    %276 = vector.shape_cast %272 : vector<8x1xi1> to vector<8x1xi1>
    %277 = vector.broadcast %276 : vector<8x1xi1> to vector<8x128xi1>
    %278 = vector.broadcast %cst_69 : f32 to vector<8x128xf32>
    %279 = arith.select %277, %275, %278 : vector<8x128xi1>, vector<8x128xf32>
    %280 = arith.index_cast %c5_i32 : i32 to index
    %c0_70 = arith.constant 0 : index
    %c0_71 = arith.constant 0 : index
    %281 = vector.load %arg18[%280, %c0_70, %c0_71] : memref<8x8x128xf32, #tpu.memory_space<vmem>>, vector<1x8x128xf32>
    %282 = vector.shape_cast %281 : vector<1x8x128xf32> to vector<8x128xf32>
    %283 = vector.shape_cast %279 : vector<8x128xf32> to vector<1x8x128xf32>
    tpu.vector_store %arg18[%280, %c0_70, %c0_71], %283 {strides = array<i32>} : memref<8x8x128xf32, #tpu.memory_space<vmem>>, vector<1x8x128xf32>,
    %c6_i32 = arith.constant 6 : i32
    %284 = arith.index_cast %c6_i32 : i32 to index
    %c0_72 = arith.constant 0 : index
    %c0_73 = arith.constant 0 : index
    %285 = vector.load %arg17[%284, %c0_72, %c0_73] : memref<8x8x384xf32, #tpu.memory_space<vmem>>, vector<1x8x384xf32>
    %286 = vector.shape_cast %285 : vector<1x8x384xf32> to vector<8x384xf32>
    %cst_74 = arith.constant dense<0.000000e+00> : vector<8x384xf32>
    %287 = tpu.matmul %275, %2, %cst_74 {dimension_numbers = #tpu.dot_dimension_numbers<[1], [0], [0], [1], [0, 0, 1, 1], [], []>} : vector<8x128xf32>, vector<128x384xf32>, vector<8x384xf32> -> vector<8x384xf32>
    %288 = vector.extract_strided_slice %286 {offsets = [0, 0], sizes = [8, 128], strides = [1, 1]} : vector<8x384xf32> to vector<8x128xf32>
    %289 = vector.extract_strided_slice %287 {offsets = [0, 0], sizes = [8, 128], strides = [1, 1]} : vector<8x384xf32> to vector<8x128xf32>
    %290 = arith.addf %288, %289 : vector<8x128xf32>
    %291 = arith.negf %290 : vector<8x128xf32>
    %292 = math.exp %291 : vector<8x128xf32>
    %cst_75 = arith.constant 1.000000e+00 : f32
    %293 = vector.broadcast %cst_75 : f32 to vector<8x128xf32>
    %294 = arith.addf %293, %292 : vector<8x128xf32>
    %295 = arith.divf %293, %294 : vector<8x128xf32>
    %296 = vector.extract_strided_slice %286 {offsets = [0, 128], sizes = [8, 128], strides = [1, 1]} : vector<8x384xf32> to vector<8x128xf32>
    %297 = vector.extract_strided_slice %287 {offsets = [0, 128], sizes = [8, 128], strides = [1, 1]} : vector<8x384xf32> to vector<8x128xf32>
    %298 = arith.addf %296, %297 : vector<8x128xf32>
    %299 = arith.negf %298 : vector<8x128xf32>
    %300 = math.exp %299 : vector<8x128xf32>
    %cst_76 = arith.constant 1.000000e+00 : f32
    %301 = vector.broadcast %cst_76 : f32 to vector<8x128xf32>
    %302 = arith.addf %301, %300 : vector<8x128xf32>
    %303 = arith.divf %301, %302 : vector<8x128xf32>
    %304 = vector.extract_strided_slice %286 {offsets = [0, 256], sizes = [8, 128], strides = [1, 1]} : vector<8x384xf32> to vector<8x128xf32>
    %305 = vector.extract_strided_slice %287 {offsets = [0, 256], sizes = [8, 128], strides = [1, 1]} : vector<8x384xf32> to vector<8x128xf32>
    %306 = vector.broadcast %3 : vector<1x128xf32> to vector<8x128xf32>
    %307 = arith.addf %305, %306 : vector<8x128xf32>
    %308 = arith.mulf %295, %307 : vector<8x128xf32>
    %309 = arith.addf %304, %308 : vector<8x128xf32>
    %310 = math.tanh %309 : vector<8x128xf32>
    %cst_77 = arith.constant 1.000000e+00 : f32
    %311 = vector.broadcast %cst_77 : f32 to vector<8x128xf32>
    %312 = arith.subf %311, %303 : vector<8x128xf32>
    %313 = arith.mulf %312, %310 : vector<8x128xf32>
    %314 = arith.mulf %303, %275 : vector<8x128xf32>
    %315 = arith.addf %313, %314 : vector<8x128xf32>
    %316 = vector.broadcast %c6_i32 : i32 to vector<8x1xi32>
    %317 = arith.cmpi slt, %316, %1 : vector<8x1xi32>
    %318 = vector.shape_cast %317 : vector<8x1xi1> to vector<8x1xi1>
    %319 = vector.broadcast %318 : vector<8x1xi1> to vector<8x128xi1>
    %320 = arith.select %319, %315, %275 : vector<8x128xi1>, vector<8x128xf32>
    %cst_78 = arith.constant 0.000000e+00 : f32
    %321 = vector.shape_cast %317 : vector<8x1xi1> to vector<8x1xi1>
    %322 = vector.broadcast %321 : vector<8x1xi1> to vector<8x128xi1>
    %323 = vector.broadcast %cst_78 : f32 to vector<8x128xf32>
    %324 = arith.select %322, %320, %323 : vector<8x128xi1>, vector<8x128xf32>
    %325 = arith.index_cast %c6_i32 : i32 to index
    %c0_79 = arith.constant 0 : index
    %c0_80 = arith.constant 0 : index
    %326 = vector.load %arg18[%325, %c0_79, %c0_80] : memref<8x8x128xf32, #tpu.memory_space<vmem>>, vector<1x8x128xf32>
    %327 = vector.shape_cast %326 : vector<1x8x128xf32> to vector<8x128xf32>
    %328 = vector.shape_cast %324 : vector<8x128xf32> to vector<1x8x128xf32>
    tpu.vector_store %arg18[%325, %c0_79, %c0_80], %328 {strides = array<i32>} : memref<8x8x128xf32, #tpu.memory_space<vmem>>, vector<1x8x128xf32>,
    %c7_i32 = arith.constant 7 : i32
    %329 = arith.index_cast %c7_i32 : i32 to index
    %c0_81 = arith.constant 0 : index
    %c0_82 = arith.constant 0 : index
    %330 = vector.load %arg17[%329, %c0_81, %c0_82] : memref<8x8x384xf32, #tpu.memory_space<vmem>>, vector<1x8x384xf32>
    %331 = vector.shape_cast %330 : vector<1x8x384xf32> to vector<8x384xf32>
    %cst_83 = arith.constant dense<0.000000e+00> : vector<8x384xf32>
    %332 = tpu.matmul %320, %2, %cst_83 {dimension_numbers = #tpu.dot_dimension_numbers<[1], [0], [0], [1], [0, 0, 1, 1], [], []>} : vector<8x128xf32>, vector<128x384xf32>, vector<8x384xf32> -> vector<8x384xf32>
    %333 = vector.extract_strided_slice %331 {offsets = [0, 0], sizes = [8, 128], strides = [1, 1]} : vector<8x384xf32> to vector<8x128xf32>
    %334 = vector.extract_strided_slice %332 {offsets = [0, 0], sizes = [8, 128], strides = [1, 1]} : vector<8x384xf32> to vector<8x128xf32>
    %335 = arith.addf %333, %334 : vector<8x128xf32>
    %336 = arith.negf %335 : vector<8x128xf32>
    %337 = math.exp %336 : vector<8x128xf32>
    %cst_84 = arith.constant 1.000000e+00 : f32
    %338 = vector.broadcast %cst_84 : f32 to vector<8x128xf32>
    %339 = arith.addf %338, %337 : vector<8x128xf32>
    %340 = arith.divf %338, %339 : vector<8x128xf32>
    %341 = vector.extract_strided_slice %331 {offsets = [0, 128], sizes = [8, 128], strides = [1, 1]} : vector<8x384xf32> to vector<8x128xf32>
    %342 = vector.extract_strided_slice %332 {offsets = [0, 128], sizes = [8, 128], strides = [1, 1]} : vector<8x384xf32> to vector<8x128xf32>
    %343 = arith.addf %341, %342 : vector<8x128xf32>
    %344 = arith.negf %343 : vector<8x128xf32>
    %345 = math.exp %344 : vector<8x128xf32>
    %cst_85 = arith.constant 1.000000e+00 : f32
    %346 = vector.broadcast %cst_85 : f32 to vector<8x128xf32>
    %347 = arith.addf %346, %345 : vector<8x128xf32>
    %348 = arith.divf %346, %347 : vector<8x128xf32>
    %349 = vector.extract_strided_slice %331 {offsets = [0, 256], sizes = [8, 128], strides = [1, 1]} : vector<8x384xf32> to vector<8x128xf32>
    %350 = vector.extract_strided_slice %332 {offsets = [0, 256], sizes = [8, 128], strides = [1, 1]} : vector<8x384xf32> to vector<8x128xf32>
    %351 = vector.broadcast %3 : vector<1x128xf32> to vector<8x128xf32>
    %352 = arith.addf %350, %351 : vector<8x128xf32>
    %353 = arith.mulf %340, %352 : vector<8x128xf32>
    %354 = arith.addf %349, %353 : vector<8x128xf32>
    %355 = math.tanh %354 : vector<8x128xf32>
    %cst_86 = arith.constant 1.000000e+00 : f32
    %356 = vector.broadcast %cst_86 : f32 to vector<8x128xf32>
    %357 = arith.subf %356, %348 : vector<8x128xf32>
    %358 = arith.mulf %357, %355 : vector<8x128xf32>
    %359 = arith.mulf %348, %320 : vector<8x128xf32>
    %360 = arith.addf %358, %359 : vector<8x128xf32>
    %361 = vector.broadcast %c7_i32 : i32 to vector<8x1xi32>
    %362 = arith.cmpi slt, %361, %1 : vector<8x1xi32>
    %363 = vector.shape_cast %362 : vector<8x1xi1> to vector<8x1xi1>
    %364 = vector.broadcast %363 : vector<8x1xi1> to vector<8x128xi1>
    %365 = arith.select %364, %360, %320 : vector<8x128xi1>, vector<8x128xf32>
    %cst_87 = arith.constant 0.000000e+00 : f32
    %366 = vector.shape_cast %362 : vector<8x1xi1> to vector<8x1xi1>
    %367 = vector.broadcast %366 : vector<8x1xi1> to vector<8x128xi1>
    %368 = vector.broadcast %cst_87 : f32 to vector<8x128xf32>
    %369 = arith.select %367, %365, %368 : vector<8x128xi1>, vector<8x128xf32>
    %370 = arith.index_cast %c7_i32 : i32 to index
    %c0_88 = arith.constant 0 : index
    %c0_89 = arith.constant 0 : index
    %371 = vector.load %arg18[%370, %c0_88, %c0_89] : memref<8x8x128xf32, #tpu.memory_space<vmem>>, vector<1x8x128xf32>
    %372 = vector.shape_cast %371 : vector<1x8x128xf32> to vector<8x128xf32>
    %373 = vector.shape_cast %369 : vector<8x128xf32> to vector<1x8x128xf32>
    tpu.vector_store %arg18[%370, %c0_88, %c0_89], %373 {strides = array<i32>} : memref<8x8x128xf32, #tpu.memory_space<vmem>>, vector<1x8x128xf32>,
    %c8_i32 = arith.constant 8 : i32
    %c0_90 = arith.constant 0 : index
    %c0_91 = arith.constant 0 : index
    %c0_92 = arith.constant 0 : index
    %374 = vector.load %arg18[%c0_90, %c0_91, %c0_92] : memref<8x8x128xf32, #tpu.memory_space<vmem>>, vector<8x8x128xf32>
    %c0_93 = arith.constant 0 : index
    %c0_94 = arith.constant 0 : index
    %375 = vector.load %arg8[%c0_93, %c0_94] : memref<128x64xf32, #tpu.memory_space<vmem>>, vector<128x64xf32>
    %cst_95 = arith.constant dense<0.000000e+00> : vector<8x64xf32>
    %376 = tpu.matmul %0, %375, %cst_95 {dimension_numbers = #tpu.dot_dimension_numbers<[1], [0], [0], [1], [0, 0, 1, 1], [], []>} : vector<8x128xf32>, vector<128x64xf32>, vector<8x64xf32> -> vector<8x64xf32>
    %c0_96 = arith.constant 0 : index
    %c0_97 = arith.constant 0 : index
    %377 = vector.load %arg11[%c0_96, %c0_97] : memref<1x64xf32, #tpu.memory_space<vmem>>, vector<1x64xf32>
    %378 = vector.broadcast %377 : vector<1x64xf32> to vector<8x64xf32>
    %379 = arith.addf %376, %378 : vector<8x64xf32>
    %380 = vector.shape_cast %374 : vector<8x8x128xf32> to vector<64x128xf32>
    %381 = vector.shape_cast %0 : vector<8x128xf32> to vector<1x8x128xf32>
    %382 = vector.broadcast %381 : vector<1x8x128xf32> to vector<8x8x128xf32>
    %383 = arith.mulf %374, %382 : vector<8x8x128xf32>
    %384 = vector.shape_cast %383 : vector<8x8x128xf32> to vector<64x128xf32>
    %c0_98 = arith.constant 0 : index
    %c0_99 = arith.constant 0 : index
    %385 = vector.load %arg9[%c0_98, %c0_99] : memref<128x64xf32, #tpu.memory_space<vmem>>, vector<128x64xf32>
    %cst_100 = arith.constant dense<0.000000e+00> : vector<64x64xf32>
    %386 = tpu.matmul %380, %385, %cst_100 {dimension_numbers = #tpu.dot_dimension_numbers<[1], [0], [0], [1], [0, 0, 1, 1], [], []>} : vector<64x128xf32>, vector<128x64xf32>, vector<64x64xf32> -> vector<64x64xf32>
    %c0_101 = arith.constant 0 : index
    %c0_102 = arith.constant 0 : index
    %387 = vector.load %arg10[%c0_101, %c0_102] : memref<128x64xf32, #tpu.memory_space<vmem>>, vector<128x64xf32>
    %cst_103 = arith.constant dense<0.000000e+00> : vector<64x64xf32>
    %388 = tpu.matmul %384, %387, %cst_103 {dimension_numbers = #tpu.dot_dimension_numbers<[1], [0], [0], [1], [0, 0, 1, 1], [], []>} : vector<64x128xf32>, vector<128x64xf32>, vector<64x64xf32> -> vector<64x64xf32>
    %389 = arith.addf %386, %388 : vector<64x64xf32>
    %390 = vector.shape_cast %389 : vector<64x64xf32> to vector<8x8x64xf32>
    %391 = vector.shape_cast %379 : vector<8x64xf32> to vector<1x8x64xf32>
    %392 = vector.broadcast %391 : vector<1x8x64xf32> to vector<8x8x64xf32>
    %393 = arith.addf %390, %392 : vector<8x8x64xf32>
    %394 = arith.negf %393 : vector<8x8x64xf32>
    %395 = math.exp %394 : vector<8x8x64xf32>
    %cst_104 = arith.constant 1.000000e+00 : f32
    %396 = vector.broadcast %cst_104 : f32 to vector<8x8x64xf32>
    %397 = arith.addf %396, %395 : vector<8x8x64xf32>
    %398 = arith.divf %396, %397 : vector<8x8x64xf32>
    %399 = vector.shape_cast %398 : vector<8x8x64xf32> to vector<64x64xf32>
    %c0_105 = arith.constant 0 : index
    %c0_106 = arith.constant 0 : index
    %400 = vector.load %arg12[%c0_105, %c0_106] : memref<64x16xf32, #tpu.memory_space<vmem>>, vector<64x16xf32>
    %cst_107 = arith.constant dense<0.000000e+00> : vector<64x16xf32>
    %401 = tpu.matmul %399, %400, %cst_107 {dimension_numbers = #tpu.dot_dimension_numbers<[1], [0], [0], [1], [0, 0, 1, 1], [], []>} : vector<64x64xf32>, vector<64x16xf32>, vector<64x16xf32> -> vector<64x16xf32>
    %c0_108 = arith.constant 0 : index
    %c0_109 = arith.constant 0 : index
    %402 = vector.load %arg13[%c0_108, %c0_109] : memref<1x16xf32, #tpu.memory_space<vmem>>, vector<1x16xf32>
    %403 = vector.broadcast %402 : vector<1x16xf32> to vector<64x16xf32>
    %404 = arith.addf %401, %403 : vector<64x16xf32>
    %405 = arith.negf %404 : vector<64x16xf32>
    %406 = math.exp %405 : vector<64x16xf32>
    %cst_110 = arith.constant 1.000000e+00 : f32
    %407 = vector.broadcast %cst_110 : f32 to vector<64x16xf32>
    %408 = arith.addf %407, %406 : vector<64x16xf32>
    %409 = arith.divf %407, %408 : vector<64x16xf32>
    %c0_111 = arith.constant 0 : index
    %c0_112 = arith.constant 0 : index
    %410 = vector.load %arg14[%c0_111, %c0_112] : memref<16x1xf32, #tpu.memory_space<vmem>>, vector<16x1xf32>
    %cst_113 = arith.constant dense<0.000000e+00> : vector<64x1xf32>
    %411 = tpu.matmul %409, %410, %cst_113 {dimension_numbers = #tpu.dot_dimension_numbers<[1], [0], [0], [1], [0, 0, 1, 1], [], []>} : vector<64x16xf32>, vector<16x1xf32>, vector<64x1xf32> -> vector<64x1xf32>
    %c0_114 = arith.constant 0 : index
    %c0_115 = arith.constant 0 : index
    %412 = vector.load %arg15[%c0_114, %c0_115] : memref<1x1xf32, #tpu.memory_space<vmem>>, vector<1x1xf32>
    %413 = vector.broadcast %412 : vector<1x1xf32> to vector<64x1xf32>
    %414 = arith.addf %411, %413 : vector<64x1xf32>
    %415 = vector.shape_cast %414 : vector<64x1xf32> to vector<8x8x1xf32>
    %416 = tpu.iota {dimensions = array<i32: 0>} : vector<8x8x1xi32>
    %417 = vector.shape_cast %1 : vector<8x1xi32> to vector<1x8x1xi32>
    %418 = vector.broadcast %417 : vector<1x8x1xi32> to vector<8x8x1xi32>
    %419 = arith.cmpi slt, %416, %418 : vector<8x8x1xi32>
    %cst_116 = arith.constant 0.000000e+00 : f32
    %420 = vector.broadcast %cst_116 : f32 to vector<8x8x1xf32>
    %421 = arith.select %419, %415, %420 : vector<8x8x1xi1>, vector<8x8x1xf32>
    %422 = vector.broadcast %421 : vector<8x8x1xf32> to vector<8x8x128xf32>
    %423 = arith.mulf %422, %374 : vector<8x8x128xf32>
    %cst_117 = arith.constant dense<0.000000e+00> : vector<8x128xf32>
    %424 = vector.multi_reduction <add>, %423, %cst_117 [0] : vector<8x8x128xf32> to vector<8x128xf32>
    %c0_118 = arith.constant 0 : index
    %c0_119 = arith.constant 0 : index
    %425 = vector.load %arg16[%c0_118, %c0_119] : memref<8x128xf32, #tpu.memory_space<vmem>>, vector<8x128xf32>
    tpu.vector_store %arg16[%c0_118, %c0_119], %424 {strides = array<i32>} : memref<8x128xf32, #tpu.memory_space<vmem>>, vector<8x128xf32>,
    return
  }
  func.func @transform_0(%arg0: i32) -> (i32, i32) {
    %c0_i32 = arith.constant 0 : i32
    %c0_i32_0 = arith.constant 0 : i32
    return %arg0, %c0_i32 : i32, i32
  }
  func.func @transform_1(%arg0: i32) -> (i32, i32, i32) {
    %c0_i32 = arith.constant 0 : i32
    %c0_i32_0 = arith.constant 0 : i32
    %c0_i32_1 = arith.constant 0 : i32
    return %c0_i32, %arg0, %c0_i32_0 : i32, i32, i32
  }
  func.func @transform_2(%arg0: i32) -> (i32, i32) {
    %c0_i32 = arith.constant 0 : i32
    %c0_i32_0 = arith.constant 0 : i32
    return %arg0, %c0_i32 : i32, i32
  }
  func.func @transform_3(%arg0: i32) -> (i32, i32) {
    %c0_i32 = arith.constant 0 : i32
    %c0_i32_0 = arith.constant 0 : i32
    %c0_i32_1 = arith.constant 0 : i32
    return %c0_i32, %c0_i32_0 : i32, i32
  }
  func.func @transform_4(%arg0: i32) -> (i32, i32) {
    %c0_i32 = arith.constant 0 : i32
    %c0_i32_0 = arith.constant 0 : i32
    %c0_i32_1 = arith.constant 0 : i32
    return %c0_i32, %c0_i32_0 : i32, i32
  }
  func.func @transform_5(%arg0: i32) -> (i32, i32) {
    %c0_i32 = arith.constant 0 : i32
    %c0_i32_0 = arith.constant 0 : i32
    %c0_i32_1 = arith.constant 0 : i32
    return %c0_i32, %c0_i32_0 : i32, i32
  }
  func.func @transform_6(%arg0: i32) -> (i32, i32) {
    %c0_i32 = arith.constant 0 : i32
    %c0_i32_0 = arith.constant 0 : i32
    %c0_i32_1 = arith.constant 0 : i32
    return %c0_i32, %c0_i32_0 : i32, i32
  }
  func.func @transform_7(%arg0: i32) -> (i32, i32) {
    %c0_i32 = arith.constant 0 : i32
    %c0_i32_0 = arith.constant 0 : i32
    %c0_i32_1 = arith.constant 0 : i32
    return %c0_i32, %c0_i32_0 : i32, i32
  }
  func.func @transform_8(%arg0: i32) -> (i32, i32) {
    %c0_i32 = arith.constant 0 : i32
    %c0_i32_0 = arith.constant 0 : i32
    %c0_i32_1 = arith.constant 0 : i32
    return %c0_i32, %c0_i32_0 : i32, i32
  }
  func.func @transform_9(%arg0: i32) -> (i32, i32) {
    %c0_i32 = arith.constant 0 : i32
    %c0_i32_0 = arith.constant 0 : i32
    %c0_i32_1 = arith.constant 0 : i32
    return %c0_i32, %c0_i32_0 : i32, i32
  }
  func.func @transform_10(%arg0: i32) -> (i32, i32) {
    %c0_i32 = arith.constant 0 : i32
    %c0_i32_0 = arith.constant 0 : i32
    %c0_i32_1 = arith.constant 0 : i32
    return %c0_i32, %c0_i32_0 : i32, i32
  }
  func.func @transform_11(%arg0: i32) -> (i32, i32) {
    %c0_i32 = arith.constant 0 : i32
    %c0_i32_0 = arith.constant 0 : i32
    %c0_i32_1 = arith.constant 0 : i32
    return %c0_i32, %c0_i32_0 : i32, i32
  }
  func.func @transform_12(%arg0: i32) -> (i32, i32) {
    %c0_i32 = arith.constant 0 : i32
    %c0_i32_0 = arith.constant 0 : i32
    %c0_i32_1 = arith.constant 0 : i32
    return %c0_i32, %c0_i32_0 : i32, i32
  }
  func.func @transform_13(%arg0: i32) -> (i32, i32) {
    %c0_i32 = arith.constant 0 : i32
    %c0_i32_0 = arith.constant 0 : i32
    %c0_i32_1 = arith.constant 0 : i32
    return %c0_i32, %c0_i32_0 : i32, i32
  }
  func.func @transform_14(%arg0: i32) -> (i32, i32) {
    %c0_i32 = arith.constant 0 : i32
    %c0_i32_0 = arith.constant 0 : i32
    %c0_i32_1 = arith.constant 0 : i32
    return %c0_i32, %c0_i32_0 : i32, i32
  }
  func.func @transform_15(%arg0: i32) -> (i32, i32) {
    %c0_i32 = arith.constant 0 : i32
    %c0_i32_0 = arith.constant 0 : i32
    return %arg0, %c0_i32 : i32, i32
  }
}

</mosaic_0001>

<llo_original>
// kernel: tpu_custom_call.1
$region0: #{tpu_custom_call.1}
  #allocation0 [shape = 'u32[]', space=smem, size = 0x4, offset = 0x4, fixed_abs, tag = 'smem constant byte address 0x4 - core index']
  #allocation1 [shape = 'u32[72,128]{1,0:T(1,128)}', space=vmem, size = 0x9000, scoped, tag = 'internal scratch']
  #allocation2 [shape = 'f32[8,8,384]{2,1,0:T(8,128)}', space=vmem, size = 0x18000, scoped, tag = 'scratch operand']
  #allocation3 [shape = 'f32[8,8,128]{2,1,0:T(8,128)}', space=vmem, size = 0x8000, scoped, tag = 'scratch operand']
  #allocation4 [shape = 'f32[1,1]{1,0:T(1,128)S(1)}', space=vmem, size = 0x200, scoped, tag = 'scoped memory for tpu_custom_call.1']
  %s0 = inlined_call_operand.vmem [shape: f32[8,128], index: 0, kind: input, shape index: {}]
  %s1 = inlined_call_operand.vmem [shape: f32[8,8,128], index: 1, kind: input, shape index: {}]
  %s2 = inlined_call_operand.vmem [shape: s32[8,1], index: 2, kind: input, shape index: {}]
  %s3 = inlined_call_operand.hbm [shape: f32[128,384], index: 3, kind: input, shape index: {}]
  %s4 = inlined_call_operand.hbm [shape: f32[128,384], index: 4, kind: input, shape index: {}]
  %s5 = inlined_call_operand.vmem [shape: f32[1,384], index: 5, kind: input, shape index: {}]
  %s6 = inlined_call_operand.vmem [shape: f32[1,128], index: 6, kind: input, shape index: {}]
  %s7 = inlined_call_operand.vmem [shape: f32[128,64], index: 7, kind: input, shape index: {}]
  %s8 = inlined_call_operand.vmem [shape: f32[128,64], index: 8, kind: input, shape index: {}]
  %s9 = inlined_call_operand.vmem [shape: f32[128,64], index: 9, kind: input, shape index: {}]
  %s10 = inlined_call_operand.vmem [shape: f32[1,64], index: 10, kind: input, shape index: {}]
  %s11 = inlined_call_operand.vmem [shape: f32[64,16], index: 11, kind: input, shape index: {}]
  %s12 = inlined_call_operand.vmem [shape: f32[1,16], index: 12, kind: input, shape index: {}]
  %s13 = inlined_call_operand.vmem [shape: f32[16,1], index: 13, kind: input, shape index: {}]
  %s14 = inlined_call_operand.<no memory space> [shape: f32[1,1], index: 14, kind: input, shape index: {}]
  %s15 = inlined_call_operand.hbm [shape: f32[8,128], index: 15, kind: output, shape index: {}]
  %s16 = sld [smem:[#allocation0]]
  $region78: #{tpu_custom_call.1} parent=0
    _
  %s18 = ssub.s32 1, %s16
  %s19 = scalar_select 0, %s18, %s16
  %v20 = vstv %s14
  %21 = vst [vmem:[#allocation4] sm:$0x1] %v20
  $region1: #{tpu_custom_call.1} parent=0
    #allocation5 [shape = 'u8[196608]{0}', space=vmem, size = 0x30000, scoped, tag = 'input window, operand 3, single buffered']
    #allocation6 [shape = 's32[1]{0}', space=sflag, size = 0x4, scoped, tag = 'scoped memory for tpu_custom_call.1']
    #allocation7 [shape = 's32[1]{0}', space=sflag, size = 0x4, scoped, tag = 'scoped memory for tpu_custom_call.1']
    #allocation8 [shape = 'u8[196608]{0}', space=vmem, size = 0x30000, scoped, tag = 'input window, operand 4, single buffered']
    #allocation9 [shape = 's32[1]{0}', space=sflag, size = 0x4, scoped, tag = 'scoped memory for tpu_custom_call.1']
    #allocation10 [shape = 'u8[4096]{0}', space=vmem, size = 0x1000, scoped, tag = 'output window, operand 0, single buffered']
    %22 = vsyncpa [#allocation6], 0
    %23 = vsyncpa [#allocation9], 0
    %24 = vsyncpa [#allocation7], 0
    // Predicated region
    $region2: #{tpu_custom_call.1} parent=1 // pred_check
      _
    $region3: #{tpu_custom_call.1} parent=1 // pred_check_branch
      %26 = sbr.rel (0) target = $region5
    $region4: #{tpu_custom_call.1} parent=1 // pred_region
      _
    $region5: #{tpu_custom_call.1} parent=1 // pred_fallthru
      _
    // Predicated region
    $region6: #{tpu_custom_call.1} parent=1 // pred_check
      _
    $region7: #{tpu_custom_call.1} parent=1 // pred_check_branch
      %28 = sbr.rel (0) target = $region9
    $region8: #{tpu_custom_call.1} parent=1 // pred_region
      _
    $region9: #{tpu_custom_call.1} parent=1 // pred_fallthru
      _
    // Predicated region
    $region10: #{tpu_custom_call.1} parent=1 // pred_check
      _
    $region11: #{tpu_custom_call.1} parent=1 // pred_check_branch
      %30 = sbr.rel (0) target = $region13
    $region12: #{tpu_custom_call.1} parent=1 // pred_region
      _
    $region13: #{tpu_custom_call.1} parent=1 // pred_fallthru
      _
    // Predicated region
    $region14: #{tpu_custom_call.1} parent=1 // pred_check
      _
    $region15: #{tpu_custom_call.1} parent=1 // pred_check_branch
      %32 = sbr.rel (0) target = $region17
    $region16: #{tpu_custom_call.1} parent=1 // pred_region
      %34 = vsyncadd [#allocation6], 0
      %s35 = sshll.u32 %s3, 4
      %s36 = int_to_ptr.hbm [resolvable:$true] %s35
      %s37 = sshll.u32 [#allocation5], 4
      %s38 = int_to_ptr.vmem [resolvable:$true] %s37
      %43 = dma.hbm_to_vmem [thread:$0]  %s36, 6144, %s38, [#allocation6], 384, 384, 24
    $region17: #{tpu_custom_call.1} parent=1 // pred_fallthru
      _
    // Predicated region
    $region18: #{tpu_custom_call.1} parent=1 // pred_check
      _
    $region19: #{tpu_custom_call.1} parent=1 // pred_check_branch
      %45 = sbr.rel (0) target = $region21
    $region20: #{tpu_custom_call.1} parent=1 // pred_region
      %47 = vsyncadd [#allocation9], 0
      %s48 = sshll.u32 %s4, 4
      %s49 = int_to_ptr.hbm [resolvable:$true] %s48
      %s50 = sshll.u32 [#allocation8], 4
      %s51 = int_to_ptr.vmem [resolvable:$true] %s50
      %56 = dma.hbm_to_vmem [thread:$0]  %s49, 6144, %s51, [#allocation9], 384, 384, 24
    $region21: #{tpu_custom_call.1} parent=1 // pred_fallthru
      _
    // Predicated region
    $region22: #{tpu_custom_call.1} parent=1 // pred_check
      _
    $region23: #{tpu_custom_call.1} parent=1 // pred_check_branch
      %58 = sbr.rel (0) target = $region25
    $region24: #{tpu_custom_call.1} parent=1 // pred_region
      _
    $region25: #{tpu_custom_call.1} parent=1 // pred_fallthru
      _
    // Predicated region
    $region26: #{tpu_custom_call.1} parent=1 // pred_check
      _
    $region27: #{tpu_custom_call.1} parent=1 // pred_check_branch
      %60 = sbr.rel (0) target = $region29
    $region28: #{tpu_custom_call.1} parent=1 // pred_region
      _
    $region29: #{tpu_custom_call.1} parent=1 // pred_fallthru
      _
    // Predicated region
    $region30: #{tpu_custom_call.1} parent=1 // pred_check
      _
    $region31: #{tpu_custom_call.1} parent=1 // pred_check_branch
      %62 = sbr.rel (0) target = $region33
    $region32: #{tpu_custom_call.1} parent=1 // pred_region
      _
    $region33: #{tpu_custom_call.1} parent=1 // pred_fallthru
      _
    // Predicated region
    $region34: #{tpu_custom_call.1} parent=1 // pred_check
      _
    $region35: #{tpu_custom_call.1} parent=1 // pred_check_branch
      %64 = sbr.rel (0) target = $region37
    $region36: #{tpu_custom_call.1} parent=1 // pred_region
      _
    $region37: #{tpu_custom_call.1} parent=1 // pred_fallthru
      _
    // Predicated region
    $region38: #{tpu_custom_call.1} parent=1 // pred_check
      _
    $region39: #{tpu_custom_call.1} parent=1 // pred_check_branch
      %66 = sbr.rel (0) target = $region41
    $region40: #{tpu_custom_call.1} parent=1 // pred_region
      _
    $region41: #{tpu_custom_call.1} parent=1 // pred_fallthru
      _
    // Predicated region
    $region42: #{tpu_custom_call.1} parent=1 // pred_check
      _
    $region43: #{tpu_custom_call.1} parent=1 // pred_check_branch
      %68 = sbr.rel (0) target = $region45
    $region44: #{tpu_custom_call.1} parent=1 // pred_region
      _
    $region45: #{tpu_custom_call.1} parent=1 // pred_fallthru
      _
    // Predicated region
    $region46: #{tpu_custom_call.1} parent=1 // pred_check
      _
    $region47: #{tpu_custom_call.1} parent=1 // pred_check_branch
      %70 = sbr.rel (0) target = $region49
    $region48: #{tpu_custom_call.1} parent=1 // pred_region
      _
    $region49: #{tpu_custom_call.1} parent=1 // pred_fallthru
      _
    // Predicated region
    $region50: #{tpu_custom_call.1} parent=1 // pred_check
      _
    $region51: #{tpu_custom_call.1} parent=1 // pred_check_branch
      %72 = sbr.rel (0) target = $region53
    $region52: #{tpu_custom_call.1} parent=1 // pred_region
      _
    $region53: #{tpu_custom_call.1} parent=1 // pred_fallthru
      _
    // Predicated region
    $region54: #{tpu_custom_call.1} parent=1 // pred_check
      _
    $region55: #{tpu_custom_call.1} parent=1 // pred_check_branch
      %74 = sbr.rel (0) target = $region57
    $region56: #{tpu_custom_call.1} parent=1 // pred_region
      _
    $region57: #{tpu_custom_call.1} parent=1 // pred_fallthru
      _
    // Predicated region
    $region58: #{tpu_custom_call.1} parent=1 // pred_check
      _
    $region59: #{tpu_custom_call.1} parent=1 // pred_check_branch
      %76 = sbr.rel (0) target = $region61
    $region60: #{tpu_custom_call.1} parent=1 // pred_region
      _
    $region61: #{tpu_custom_call.1} parent=1 // pred_fallthru
      _
    // Predicated region
    $region62: #{tpu_custom_call.1} parent=1 // pred_check
      _
    $region63: #{tpu_custom_call.1} parent=1 // pred_check_branch
      %78 = sbr.rel (0) target = $region65
    $region64: #{tpu_custom_call.1} parent=1 // pred_region
      %80 = dma.done [#allocation6], 6144
    $region65: #{tpu_custom_call.1} parent=1 // pred_fallthru
      _
    // Predicated region
    $region66: #{tpu_custom_call.1} parent=1 // pred_check
      _
    $region67: #{tpu_custom_call.1} parent=1 // pred_check_branch
      %82 = sbr.rel (0) target = $region69
    $region68: #{tpu_custom_call.1} parent=1 // pred_region
      %84 = dma.done [#allocation9], 6144
    $region69: #{tpu_custom_call.1} parent=1 // pred_fallthru
      _
    %v85 = vld [vmem:[%s0] sm:$0xff]
    %v86 = vld [vmem:[%s2] sm:$0xff]
    %v87 = vld [vmem:[#allocation8] sm:$0xff]
    %v88 = vld [vmem:[#allocation8 + $0x8] sm:$0xff]
    %v89 = vld [vmem:[#allocation8 + $0x10] sm:$0xff]
    %v90 = vld [vmem:[#allocation8 + $0x18] sm:$0xff]
    %v91 = vld [vmem:[#allocation8 + $0x20] sm:$0xff]
    %v92 = vld [vmem:[#allocation8 + $0x28] sm:$0xff]
    %v93 = vld [vmem:[#allocation8 + $0x30] sm:$0xff]
    %v94 = vld [vmem:[#allocation8 + $0x38] sm:$0xff]
    %v95 = vld [vmem:[#allocation8 + $0x40] sm:$0xff]
    %v96 = vld [vmem:[#allocation8 + $0x48] sm:$0xff]
    %v97 = vld [vmem:[#allocation8 + $0x50] sm:$0xff]
    %v98 = vld [vmem:[#allocation8 + $0x58] sm:$0xff]
    %v99 = vld [vmem:[#allocation8 + $0x60] sm:$0xff]
    %v100 = vld [vmem:[#allocation8 + $0x68] sm:$0xff]
    %v101 = vld [vmem:[#allocation8 + $0x70] sm:$0xff]
    %v102 = vld [vmem:[#allocation8 + $0x78] sm:$0xff]
    %v103 = vld [vmem:[#allocation8 + $0x80] sm:$0xff]
    %v104 = vld [vmem:[#allocation8 + $0x88] sm:$0xff]
    %v105 = vld [vmem:[#allocation8 + $0x90] sm:$0xff]
    %v106 = vld [vmem:[#allocation8 + $0x98] sm:$0xff]
    %v107 = vld [vmem:[#allocation8 + $0xa0] sm:$0xff]
    %v108 = vld [vmem:[#allocation8 + $0xa8] sm:$0xff]
    %v109 = vld [vmem:[#allocation8 + $0xb0] sm:$0xff]
    %v110 = vld [vmem:[#allocation8 + $0xb8] sm:$0xff]
    %v111 = vld [vmem:[#allocation8 + $0xc0] sm:$0xff]
    %v112 = vld [vmem:[#allocation8 + $0xc8] sm:$0xff]
    %v113 = vld [vmem:[#allocation8 + $0xd0] sm:$0xff]
    %v114 = vld [vmem:[#allocation8 + $0xd8] sm:$0xff]
    %v115 = vld [vmem:[#allocation8 + $0xe0] sm:$0xff]
    %v116 = vld [vmem:[#allocation8 + $0xe8] sm:$0xff]
    %v117 = vld [vmem:[#allocation8 + $0xf0] sm:$0xff]
    %v118 = vld [vmem:[#allocation8 + $0xf8] sm:$0xff]
    %v119 = vld [vmem:[#allocation8 + $0x100] sm:$0xff]
    %v120 = vld [vmem:[#allocation8 + $0x108] sm:$0xff]
    %v121 = vld [vmem:[#allocation8 + $0x110] sm:$0xff]
    %v122 = vld [vmem:[#allocation8 + $0x118] sm:$0xff]
    %v123 = vld [vmem:[#allocation8 + $0x120] sm:$0xff]
    %v124 = vld [vmem:[#allocation8 + $0x128] sm:$0xff]
    %v125 = vld [vmem:[#allocation8 + $0x130] sm:$0xff]
    %v126 = vld [vmem:[#allocation8 + $0x138] sm:$0xff]
    %v127 = vld [vmem:[#allocation8 + $0x140] sm:$0xff]
    %v128 = vld [vmem:[#allocation8 + $0x148] sm:$0xff]
    %v129 = vld [vmem:[#allocation8 + $0x150] sm:$0xff]
    %v130 = vld [vmem:[#allocation8 + $0x158] sm:$0xff]
    %v131 = vld [vmem:[#allocation8 + $0x160] sm:$0xff]
    %v132 = vld [vmem:[#allocation8 + $0x168] sm:$0xff]
    %v133 = vld [vmem:[#allocation8 + $0x170] sm:$0xff]
    %v134 = vld [vmem:[#allocation8 + $0x178] sm:$0xff]
    %v135 = vld [vmem:[%s6] sm:$0x1]
    %v136 = vld [vmem:[%s1] sm:$0xff]
    %v137 = vld [vmem:[%s1 + $0x8] sm:$0xff]
    %v138 = vld [vmem:[%s1 + $0x10] sm:$0xff]
    %v139 = vld [vmem:[%s1 + $0x18] sm:$0xff]
    %v140 = vld [vmem:[%s1 + $0x20] sm:$0xff]
    %v141 = vld [vmem:[%s1 + $0x28] sm:$0xff]
    %v142 = vld [vmem:[%s1 + $0x30] sm:$0xff]
    %v143 = vld [vmem:[%s1 + $0x38] sm:$0xff]
    %v144 = vld [vmem:[#allocation5] sm:$0xff]
    %v145 = vld [vmem:[#allocation5 + $0x8] sm:$0xff]
    %v146 = vld [vmem:[#allocation5 + $0x10] sm:$0xff]
    %v147 = vld [vmem:[#allocation5 + $0x18] sm:$0xff]
    %v148 = vld [vmem:[#allocation5 + $0x20] sm:$0xff]
    %v149 = vld [vmem:[#allocation5 + $0x28] sm:$0xff]
    %v150 = vld [vmem:[#allocation5 + $0x30] sm:$0xff]
    %v151 = vld [vmem:[#allocation5 + $0x38] sm:$0xff]
    %v152 = vld [vmem:[#allocation5 + $0x40] sm:$0xff]
    %v153 = vld [vmem:[#allocation5 + $0x48] sm:$0xff]
    %v154 = vld [vmem:[#allocation5 + $0x50] sm:$0xff]
    %v155 = vld [vmem:[#allocation5 + $0x58] sm:$0xff]
    %v156 = vld [vmem:[#allocation5 + $0x60] sm:$0xff]
    %v157 = vld [vmem:[#allocation5 + $0x68] sm:$0xff]
    %v158 = vld [vmem:[#allocation5 + $0x70] sm:$0xff]
    %v159 = vld [vmem:[#allocation5 + $0x78] sm:$0xff]
    %v160 = vld [vmem:[#allocation5 + $0x80] sm:$0xff]
    %v161 = vld [vmem:[#allocation5 + $0x88] sm:$0xff]
    %v162 = vld [vmem:[#allocation5 + $0x90] sm:$0xff]
    %v163 = vld [vmem:[#allocation5 + $0x98] sm:$0xff]
    %v164 = vld [vmem:[#allocation5 + $0xa0] sm:$0xff]
    %v165 = vld [vmem:[#allocation5 + $0xa8] sm:$0xff]
    %v166 = vld [vmem:[#allocation5 + $0xb0] sm:$0xff]
    %v167 = vld [vmem:[#allocation5 + $0xb8] sm:$0xff]
    %v168 = vld [vmem:[#allocation5 + $0xc0] sm:$0xff]
    %v169 = vld [vmem:[#allocation5 + $0xc8] sm:$0xff]
    %v170 = vld [vmem:[#allocation5 + $0xd0] sm:$0xff]
    %v171 = vld [vmem:[#allocation5 + $0xd8] sm:$0xff]
    %v172 = vld [vmem:[#allocation5 + $0xe0] sm:$0xff]
    %v173 = vld [vmem:[#allocation5 + $0xe8] sm:$0xff]
    %v174 = vld [vmem:[#allocation5 + $0xf0] sm:$0xff]
    %v175 = vld [vmem:[#allocation5 + $0xf8] sm:$0xff]
    %v176 = vld [vmem:[#allocation5 + $0x100] sm:$0xff]
    %v177 = vld [vmem:[#allocation5 + $0x108] sm:$0xff]
    %v178 = vld [vmem:[#allocation5 + $0x110] sm:$0xff]
    %v179 = vld [vmem:[#allocation5 + $0x118] sm:$0xff]
    %v180 = vld [vmem:[#allocation5 + $0x120] sm:$0xff]
    %v181 = vld [vmem:[#allocation5 + $0x128] sm:$0xff]
    %v182 = vld [vmem:[#allocation5 + $0x130] sm:$0xff]
    %v183 = vld [vmem:[#allocation5 + $0x138] sm:$0xff]
    %v184 = vld [vmem:[#allocation5 + $0x140] sm:$0xff]
    %v185 = vld [vmem:[#allocation5 + $0x148] sm:$0xff]
    %v186 = vld [vmem:[#allocation5 + $0x150] sm:$0xff]
    %v187 = vld [vmem:[#allocation5 + $0x158] sm:$0xff]
    %v188 = vld [vmem:[#allocation5 + $0x160] sm:$0xff]
    %v189 = vld [vmem:[#allocation5 + $0x168] sm:$0xff]
    %v190 = vld [vmem:[#allocation5 + $0x170] sm:$0xff]
    %v191 = vld [vmem:[#allocation5 + $0x178] sm:$0xff]
    %v192 = vld [vmem:[%s5] sm:$0x7]
    %v194 = vperm.slane %v192, 0
    %v195 = vperm.slane %v192, 1
    %v196 = vperm.slane %v192, 2
    %200 = vmatpush.msra.mxu0 %v189
    %201 = vmatpush.msra.mxu0 %v186
    %202 = vmatpush.msra.mxu0 %v183
    %203 = vmatpush.msra.mxu0 %v180
    %204 = vmatpush.msra.mxu0 %v177
    %205 = vmatpush.msra.mxu0 %v174
    %206 = vmatpush.msra.mxu0 %v171
    %207 = vmatpush.msra.mxu0 %v168
    %208 = vmatpush.msra.mxu0 %v165
    %209 = vmatpush.msra.mxu0 %v162
    %210 = vmatpush.msra.mxu0 %v159
    %211 = vmatpush.msra.mxu0 %v156
    %212 = vmatpush.msra.mxu0 %v153
    %213 = vmatpush.msra.mxu0 %v150
    %214 = vmatpush.msra.mxu0 %v147
    %215 = vmatpush.msra.mxu0 %v144
    %216 = vmatmul.f32.gmra.mxu0 %v136
    %v217 = vpop.f32.mrf.mxu0
    %v218 = vadd.f32 %v194, %v217
    %219 = vmatmul.f32.gmra.mxu0 %v137
    %v220 = vpop.f32.mrf.mxu0
    %v221 = vadd.f32 %v194, %v220
    %222 = vmatmul.f32.gmra.mxu0 %v138
    %v223 = vpop.f32.mrf.mxu0
    %v224 = vadd.f32 %v194, %v223
    %225 = vmatmul.f32.gmra.mxu0 %v139
    %v226 = vpop.f32.mrf.mxu0
    %v227 = vadd.f32 %v194, %v226
    %228 = vmatmul.f32.gmra.mxu0 %v140
    %v229 = vpop.f32.mrf.mxu0
    %v230 = vadd.f32 %v194, %v229
    %231 = vmatmul.f32.gmra.mxu0 %v141
    %v232 = vpop.f32.mrf.mxu0
    %v233 = vadd.f32 %v194, %v232
    %234 = vmatmul.f32.gmra.mxu0 %v142
    %v235 = vpop.f32.mrf.mxu0
    %v236 = vadd.f32 %v194, %v235
    %237 = vmatmul.f32.gmra.mxu0 %v143
    %v238 = vpop.f32.mrf.mxu0
    %v239 = vadd.f32 %v194, %v238
    %240 = vdwg.mxu0
    %241 = vmatpush.msra.mxu0 %v190
    %242 = vmatpush.msra.mxu0 %v187
    %243 = vmatpush.msra.mxu0 %v184
    %244 = vmatpush.msra.mxu0 %v181
    %245 = vmatpush.msra.mxu0 %v178
    %246 = vmatpush.msra.mxu0 %v175
    %247 = vmatpush.msra.mxu0 %v172
    %248 = vmatpush.msra.mxu0 %v169
    %249 = vmatpush.msra.mxu0 %v166
    %250 = vmatpush.msra.mxu0 %v163
    %251 = vmatpush.msra.mxu0 %v160
    %252 = vmatpush.msra.mxu0 %v157
    %253 = vmatpush.msra.mxu0 %v154
    %254 = vmatpush.msra.mxu0 %v151
    %255 = vmatpush.msra.mxu0 %v148
    %256 = vmatpush.msra.mxu0 %v145
    %257 = vmatmul.f32.gmra.mxu0 %v136
    %v258 = vpop.f32.mrf.mxu0
    %v259 = vadd.f32 %v195, %v258
    %260 = vmatmul.f32.gmra.mxu0 %v137
    %v261 = vpop.f32.mrf.mxu0
    %v262 = vadd.f32 %v195, %v261
    %263 = vmatmul.f32.gmra.mxu0 %v138
    %v264 = vpop.f32.mrf.mxu0
    %v265 = vadd.f32 %v195, %v264
    %266 = vmatmul.f32.gmra.mxu0 %v139
    %v267 = vpop.f32.mrf.mxu0
    %v268 = vadd.f32 %v195, %v267
    %269 = vmatmul.f32.gmra.mxu0 %v140
    %v270 = vpop.f32.mrf.mxu0
    %v271 = vadd.f32 %v195, %v270
    %272 = vmatmul.f32.gmra.mxu0 %v141
    %v273 = vpop.f32.mrf.mxu0
    %v274 = vadd.f32 %v195, %v273
    %275 = vmatmul.f32.gmra.mxu0 %v142
    %v276 = vpop.f32.mrf.mxu0
    %v277 = vadd.f32 %v195, %v276
    %278 = vmatmul.f32.gmra.mxu0 %v143
    %v279 = vpop.f32.mrf.mxu0
    %v280 = vadd.f32 %v195, %v279
    %281 = vdwg.mxu0
    %282 = vmatpush.msra.mxu0 %v191
    %283 = vmatpush.msra.mxu0 %v188
    %284 = vmatpush.msra.mxu0 %v185
    %285 = vmatpush.msra.mxu0 %v182
    %286 = vmatpush.msra.mxu0 %v179
    %287 = vmatpush.msra.mxu0 %v176
    %288 = vmatpush.msra.mxu0 %v173
    %289 = vmatpush.msra.mxu0 %v170
    %290 = vmatpush.msra.mxu0 %v167
    %291 = vmatpush.msra.mxu0 %v164
    %292 = vmatpush.msra.mxu0 %v161
    %293 = vmatpush.msra.mxu0 %v158
    %294 = vmatpush.msra.mxu0 %v155
    %295 = vmatpush.msra.mxu0 %v152
    %296 = vmatpush.msra.mxu0 %v149
    %297 = vmatpush.msra.mxu0 %v146
    %298 = vmatmul.f32.gmra.mxu0 %v136
    %v299 = vpop.f32.mrf.mxu0
    %v300 = vadd.f32 %v196, %v299
    %301 = vmatmul.f32.gmra.mxu0 %v137
    %v302 = vpop.f32.mrf.mxu0
    %v303 = vadd.f32 %v196, %v302
    %304 = vmatmul.f32.gmra.mxu0 %v138
    %v305 = vpop.f32.mrf.mxu0
    %v306 = vadd.f32 %v196, %v305
    %307 = vmatmul.f32.gmra.mxu0 %v139
    %v308 = vpop.f32.mrf.mxu0
    %v309 = vadd.f32 %v196, %v308
    %310 = vmatmul.f32.gmra.mxu0 %v140
    %v311 = vpop.f32.mrf.mxu0
    %v312 = vadd.f32 %v196, %v311
    %313 = vmatmul.f32.gmra.mxu0 %v141
    %v314 = vpop.f32.mrf.mxu0
    %v315 = vadd.f32 %v196, %v314
    %316 = vmatmul.f32.gmra.mxu0 %v142
    %v317 = vpop.f32.mrf.mxu0
    %v318 = vadd.f32 %v196, %v317
    %319 = vmatmul.f32.gmra.mxu0 %v143
    %v320 = vpop.f32.mrf.mxu0
    %v321 = vadd.f32 %v196, %v320
    %322 = vdwg.mxu0
    %323 = vst [vmem:[#allocation2] sm:$0xff] %v218
    %324 = vst [vmem:[#allocation2 + $0x8] sm:$0xff] %v259
    %325 = vst [vmem:[#allocation2 + $0x10] sm:$0xff] %v300
    %326 = vst [vmem:[#allocation2 + $0x18] sm:$0xff] %v221
    %327 = vst [vmem:[#allocation2 + $0x20] sm:$0xff] %v262
    %328 = vst [vmem:[#allocation2 + $0x28] sm:$0xff] %v303
    %329 = vst [vmem:[#allocation2 + $0x30] sm:$0xff] %v224
    %330 = vst [vmem:[#allocation2 + $0x38] sm:$0xff] %v265
    %331 = vst [vmem:[#allocation2 + $0x40] sm:$0xff] %v306
    %332 = vst [vmem:[#allocation2 + $0x48] sm:$0xff] %v227
    %333 = vst [vmem:[#allocation2 + $0x50] sm:$0xff] %v268
    %334 = vst [vmem:[#allocation2 + $0x58] sm:$0xff] %v309
    %335 = vst [vmem:[#allocation2 + $0x60] sm:$0xff] %v230
    %336 = vst [vmem:[#allocation2 + $0x68] sm:$0xff] %v271
    %337 = vst [vmem:[#allocation2 + $0x70] sm:$0xff] %v312
    %338 = vst [vmem:[#allocation2 + $0x78] sm:$0xff] %v233
    %339 = vst [vmem:[#allocation2 + $0x80] sm:$0xff] %v274
    %340 = vst [vmem:[#allocation2 + $0x88] sm:$0xff] %v315
    %341 = vst [vmem:[#allocation2 + $0x90] sm:$0xff] %v236
    %342 = vst [vmem:[#allocation2 + $0x98] sm:$0xff] %v277
    %343 = vst [vmem:[#allocation2 + $0xa0] sm:$0xff] %v318
    %344 = vst [vmem:[#allocation2 + $0xa8] sm:$0xff] %v239
    %345 = vst [vmem:[#allocation2 + $0xb0] sm:$0xff] %v280
    %346 = vst [vmem:[#allocation2 + $0xb8] sm:$0xff] %v321
    %v347 = vld [vmem:[#allocation2] sm:$0xff]
    %v348 = vld [vmem:[#allocation2 + $0x8] sm:$0xff]
    %v349 = vld [vmem:[#allocation2 + $0x10] sm:$0xff]
    %350 = vmatpush.msra.mxu0 %v132
    %351 = vmatpush.msra.mxu0 %v129
    %352 = vmatpush.msra.mxu0 %v126
    %353 = vmatpush.msra.mxu0 %v123
    %354 = vmatpush.msra.mxu0 %v120
    %355 = vmatpush.msra.mxu0 %v117
    %356 = vmatpush.msra.mxu0 %v114
    %357 = vmatpush.msra.mxu0 %v111
    %358 = vmatpush.msra.mxu0 %v108
    %359 = vmatpush.msra.mxu0 %v105
    %360 = vmatpush.msra.mxu0 %v102
    %361 = vmatpush.msra.mxu0 %v99
    %362 = vmatpush.msra.mxu0 %v96
    %363 = vmatpush.msra.mxu0 %v93
    %364 = vmatpush.msra.mxu0 %v90
    %365 = vmatpush.msra.mxu0 %v87
    %366 = vmatmul.f32.gmra.mxu0 0.0
    %v367 = vpop.f32.mrf.mxu0
    %v368 = vadd.f32 0.0, %v367
    %369 = vdwg.mxu0
    %370 = vmatpush.msra.mxu0 %v133
    %371 = vmatpush.msra.mxu0 %v130
    %372 = vmatpush.msra.mxu0 %v127
    %373 = vmatpush.msra.mxu0 %v124
    %374 = vmatpush.msra.mxu0 %v121
    %375 = vmatpush.msra.mxu0 %v118
    %376 = vmatpush.msra.mxu0 %v115
    %377 = vmatpush.msra.mxu0 %v112
    %378 = vmatpush.msra.mxu0 %v109
    %379 = vmatpush.msra.mxu0 %v106
    %380 = vmatpush.msra.mxu0 %v103
    %381 = vmatpush.msra.mxu0 %v100
    %382 = vmatpush.msra.mxu0 %v97
    %383 = vmatpush.msra.mxu0 %v94
    %384 = vmatpush.msra.mxu0 %v91
    %385 = vmatpush.msra.mxu0 %v88
    %386 = vmatmul.f32.gmra.mxu0 0.0
    %v387 = vpop.f32.mrf.mxu0
    %v388 = vadd.f32 0.0, %v387
    %389 = vdwg.mxu0
    %390 = vmatpush.msra.mxu0 %v134
    %391 = vmatpush.msra.mxu0 %v131
    %392 = vmatpush.msra.mxu0 %v128
    %393 = vmatpush.msra.mxu0 %v125
    %394 = vmatpush.msra.mxu0 %v122
    %395 = vmatpush.msra.mxu0 %v119
    %396 = vmatpush.msra.mxu0 %v116
    %397 = vmatpush.msra.mxu0 %v113
    %398 = vmatpush.msra.mxu0 %v110
    %399 = vmatpush.msra.mxu0 %v107
    %400 = vmatpush.msra.mxu0 %v104
    %401 = vmatpush.msra.mxu0 %v101
    %402 = vmatpush.msra.mxu0 %v98
    %403 = vmatpush.msra.mxu0 %v95
    %404 = vmatpush.msra.mxu0 %v92
    %405 = vmatpush.msra.mxu0 %v89
    %406 = vmatmul.f32.gmra.mxu0 0.0
    %v407 = vpop.f32.mrf.mxu0
    %v408 = vadd.f32 0.0, %v407
    %409 = vdwg.mxu0
    %v410 = vadd.f32 %v347, %v368
    %v411 = vxor.u32 %v410, 2147483648
    %v412 = vmul.f32 %v411, 1.442695
    %v413 = vpow.pop %v412
    %v414 = vadd.f32 %v413, 1.0
    %v415 = vrcp.pop %v414
    %v416 = vmul.f32 %v414, %v415
    %v417 = vsub.f32 1.0, %v416
    %v418 = vmul.f32 %v415, %v417
    %v419 = vadd.f32 %v415, %v418
    %vm420 = vweird.f32 %v414
    %vm421 = vweird.f32 %v415
    %vm422 = vmor %vm420, %vm421
    %v423 = vsel %vm422, %v415, %v419
    %v424 = vand.u32 2147483647, %v414
    %vm425 = vcmp.eq.f32.partialorder %v424, 8.507059e+37
    %v426 = vand.u32 %v414, 2147483648
    %v427 = vor.u32 1.1754944e-38, %v426
    %v428 = vsel %vm425, %v427, %v423
    %v429 = vmul.f32 1.0, %v428
    %v430 = vadd.f32 %v348, %v388
    %v431 = vxor.u32 %v430, 2147483648
    %v432 = vmul.f32 %v431, 1.442695
    %v433 = vpow.pop %v432
    %v434 = vadd.f32 %v433, 1.0
    %v435 = vrcp.pop %v434
    %v436 = vmul.f32 %v434, %v435
    %v437 = vsub.f32 1.0, %v436
    %v438 = vmul.f32 %v435, %v437
    %v439 = vadd.f32 %v435, %v438
    %vm440 = vweird.f32 %v434
    %vm441 = vweird.f32 %v435
    %vm442 = vmor %vm440, %vm441
    %v443 = vsel %vm442, %v435, %v439
    %v444 = vand.u32 2147483647, %v434
    %vm445 = vcmp.eq.f32.partialorder %v444, 8.507059e+37
    %v446 = vand.u32 %v434, 2147483648
    %v447 = vor.u32 1.1754944e-38, %v446
    %v448 = vsel %vm445, %v447, %v443
    %v449 = vmul.f32 1.0, %v448
    %v451 = vperm.slane %v135, 0
    %v453 = vadd.f32 %v408, %v451
    %v454 = vmul.f32 %v429, %v453
    %v455 = vadd.f32 %v349, %v454
    %v456 = vtanh.pop %v455
    %v457 = vsub.f32 1.0, %v449
    %v458 = vmul.f32 %v457, %v456
    %v459 = vmul.f32 %v449, 0.0
    %v460 = vadd.f32 %v458, %v459
    %vm461 = vcmp.gt.s32.totalorder %v86, 0
    %v462 = vsel %vm461, 1, 0
    %463 = vset.pattern.permute.xlu0 0
    %464 = vperm.xlu0 %463, %v462
    %v465 = vpop.permute.xlu0 %464
    %vm466 = vcmp.eq.s32.totalorder %v465, 1
    %v467 = vsel %vm466, %v460, 0.0
    %468 = vst [vmem:[#allocation3] sm:$0xff] %v467
    %s469 = scalar_lea.vmem [#allocation2], 24
    %v470 = vld [vmem:[%s469] sm:$0xff]
    %v471 = vld [vmem:[%s469 + $0x8] sm:$0xff]
    %v472 = vld [vmem:[%s469 + $0x10] sm:$0xff]
    %473 = vmatpush.msra.mxu0 %v132
    %474 = vmatpush.msra.mxu0 %v129
    %475 = vmatpush.msra.mxu0 %v126
    %476 = vmatpush.msra.mxu0 %v123
    %477 = vmatpush.msra.mxu0 %v120
    %478 = vmatpush.msra.mxu0 %v117
    %479 = vmatpush.msra.mxu0 %v114
    %480 = vmatpush.msra.mxu0 %v111
    %481 = vmatpush.msra.mxu0 %v108
    %482 = vmatpush.msra.mxu0 %v105
    %483 = vmatpush.msra.mxu0 %v102
    %484 = vmatpush.msra.mxu0 %v99
    %485 = vmatpush.msra.mxu0 %v96
    %486 = vmatpush.msra.mxu0 %v93
    %487 = vmatpush.msra.mxu0 %v90
    %488 = vmatpush.msra.mxu0 %v87
    %489 = vmatmul.f32.gmra.mxu0 %v467
    %v490 = vpop.f32.mrf.mxu0
    %v491 = vadd.f32 0.0, %v490
    %492 = vdwg.mxu0
    %493 = vmatpush.msra.mxu0 %v133
    %494 = vmatpush.msra.mxu0 %v130
    %495 = vmatpush.msra.mxu0 %v127
    %496 = vmatpush.msra.mxu0 %v124
    %497 = vmatpush.msra.mxu0 %v121
    %498 = vmatpush.msra.mxu0 %v118
    %499 = vmatpush.msra.mxu0 %v115
    %500 = vmatpush.msra.mxu0 %v112
    %501 = vmatpush.msra.mxu0 %v109
    %502 = vmatpush.msra.mxu0 %v106
    %503 = vmatpush.msra.mxu0 %v103
    %504 = vmatpush.msra.mxu0 %v100
    %505 = vmatpush.msra.mxu0 %v97
    %506 = vmatpush.msra.mxu0 %v94
    %507 = vmatpush.msra.mxu0 %v91
    %508 = vmatpush.msra.mxu0 %v88
    %509 = vmatmul.f32.gmra.mxu0 %v467
    %v510 = vpop.f32.mrf.mxu0
    %v511 = vadd.f32 0.0, %v510
    %512 = vdwg.mxu0
    %513 = vmatpush.msra.mxu0 %v134
    %514 = vmatpush.msra.mxu0 %v131
    %515 = vmatpush.msra.mxu0 %v128
    %516 = vmatpush.msra.mxu0 %v125
    %517 = vmatpush.msra.mxu0 %v122
    %518 = vmatpush.msra.mxu0 %v119
    %519 = vmatpush.msra.mxu0 %v116
    %520 = vmatpush.msra.mxu0 %v113
    %521 = vmatpush.msra.mxu0 %v110
    %522 = vmatpush.msra.mxu0 %v107
    %523 = vmatpush.msra.mxu0 %v104
    %524 = vmatpush.msra.mxu0 %v101
    %525 = vmatpush.msra.mxu0 %v98
    %526 = vmatpush.msra.mxu0 %v95
    %527 = vmatpush.msra.mxu0 %v92
    %528 = vmatpush.msra.mxu0 %v89
    %529 = vmatmul.f32.gmra.mxu0 %v467
    %v530 = vpop.f32.mrf.mxu0
    %v531 = vadd.f32 0.0, %v530
    %532 = vdwg.mxu0
    %v533 = vadd.f32 %v470, %v491
    %v534 = vxor.u32 %v533, 2147483648
    %v535 = vmul.f32 %v534, 1.442695
    %v536 = vpow.pop %v535
    %v537 = vadd.f32 %v536, 1.0
    %v538 = vrcp.pop %v537
    %v539 = vmul.f32 %v537, %v538
    %v540 = vsub.f32 1.0, %v539
    %v541 = vmul.f32 %v538, %v540
    %v542 = vadd.f32 %v538, %v541
    %vm543 = vweird.f32 %v537
    %vm544 = vweird.f32 %v538
    %vm545 = vmor %vm543, %vm544
    %v546 = vsel %vm545, %v538, %v542
    %v547 = vand.u32 2147483647, %v537
    %vm548 = vcmp.eq.f32.partialorder %v547, 8.507059e+37
    %v549 = vand.u32 %v537, 2147483648
    %v550 = vor.u32 1.1754944e-38, %v549
    %v551 = vsel %vm548, %v550, %v546
    %v552 = vmul.f32 1.0, %v551
    %v553 = vadd.f32 %v471, %v511
    %v554 = vxor.u32 %v553, 2147483648
    %v555 = vmul.f32 %v554, 1.442695
    %v556 = vpow.pop %v555
    %v557 = vadd.f32 %v556, 1.0
    %v558 = vrcp.pop %v557
    %v559 = vmul.f32 %v557, %v558
    %v560 = vsub.f32 1.0, %v559
    %v561 = vmul.f32 %v558, %v560
    %v562 = vadd.f32 %v558, %v561
    %vm563 = vweird.f32 %v557
    %vm564 = vweird.f32 %v558
    %vm565 = vmor %vm563, %vm564
    %v566 = vsel %vm565, %v558, %v562
    %v567 = vand.u32 2147483647, %v557
    %vm568 = vcmp.eq.f32.partialorder %v567, 8.507059e+37
    %v569 = vand.u32 %v557, 2147483648
    %v570 = vor.u32 1.1754944e-38, %v569
    %v571 = vsel %vm568, %v570, %v566
    %v572 = vmul.f32 1.0, %v571
    %v573 = vadd.f32 %v531, %v451
    %v574 = vmul.f32 %v552, %v573
    %v575 = vadd.f32 %v472, %v574
    %v576 = vtanh.pop %v575
    %v577 = vsub.f32 1.0, %v572
    %v578 = vmul.f32 %v577, %v576
    %v579 = vmul.f32 %v572, %v467
    %v580 = vadd.f32 %v578, %v579
    %vm581 = vcmp.gt.s32.totalorder %v86, 1
    %v582 = vsel %vm581, 1, 0
    %583 = vset.pattern.permute.xlu0 0
    %584 = vperm.xlu0 %583, %v582
    %v585 = vpop.permute.xlu0 %584
    %vm586 = vcmp.eq.s32.totalorder %v585, 1
    %v587 = vsel %vm586, %v580, %v467
    %v588 = vsel %vm586, %v580, 0.0
    %s589 = scalar_lea.vmem [#allocation3], 8
    %590 = vst [vmem:[%s589] sm:$0xff] %v588
    %s591 = scalar_lea.vmem [#allocation2], 48
    %v592 = vld [vmem:[%s591] sm:$0xff]
    %v593 = vld [vmem:[%s591 + $0x8] sm:$0xff]
    %v594 = vld [vmem:[%s591 + $0x10] sm:$0xff]
    %595 = vmatpush.msra.mxu0 %v132
    %596 = vmatpush.msra.mxu0 %v129
    %597 = vmatpush.msra.mxu0 %v126
    %598 = vmatpush.msra.mxu0 %v123
    %599 = vmatpush.msra.mxu0 %v120
    %600 = vmatpush.msra.mxu0 %v117
    %601 = vmatpush.msra.mxu0 %v114
    %602 = vmatpush.msra.mxu0 %v111
    %603 = vmatpush.msra.mxu0 %v108
    %604 = vmatpush.msra.mxu0 %v105
    %605 = vmatpush.msra.mxu0 %v102
    %606 = vmatpush.msra.mxu0 %v99
    %607 = vmatpush.msra.mxu0 %v96
    %608 = vmatpush.msra.mxu0 %v93
    %609 = vmatpush.msra.mxu0 %v90
    %610 = vmatpush.msra.mxu0 %v87
    %611 = vmatmul.f32.gmra.mxu0 %v587
    %v612 = vpop.f32.mrf.mxu0
    %v613 = vadd.f32 0.0, %v612
    %614 = vdwg.mxu0
    %615 = vmatpush.msra.mxu0 %v133
    %616 = vmatpush.msra.mxu0 %v130
    %617 = vmatpush.msra.mxu0 %v127
    %618 = vmatpush.msra.mxu0 %v124
    %619 = vmatpush.msra.mxu0 %v121
    %620 = vmatpush.msra.mxu0 %v118
    %621 = vmatpush.msra.mxu0 %v115
    %622 = vmatpush.msra.mxu0 %v112
    %623 = vmatpush.msra.mxu0 %v109
    %624 = vmatpush.msra.mxu0 %v106
    %625 = vmatpush.msra.mxu0 %v103
    %626 = vmatpush.msra.mxu0 %v100
    %627 = vmatpush.msra.mxu0 %v97
    %628 = vmatpush.msra.mxu0 %v94
    %629 = vmatpush.msra.mxu0 %v91
    %630 = vmatpush.msra.mxu0 %v88
    %631 = vmatmul.f32.gmra.mxu0 %v587
    %v632 = vpop.f32.mrf.mxu0
    %v633 = vadd.f32 0.0, %v632
    %634 = vdwg.mxu0
    %635 = vmatpush.msra.mxu0 %v134
    %636 = vmatpush.msra.mxu0 %v131
    %637 = vmatpush.msra.mxu0 %v128
    %638 = vmatpush.msra.mxu0 %v125
    %639 = vmatpush.msra.mxu0 %v122
    %640 = vmatpush.msra.mxu0 %v119
    %641 = vmatpush.msra.mxu0 %v116
    %642 = vmatpush.msra.mxu0 %v113
    %643 = vmatpush.msra.mxu0 %v110
    %644 = vmatpush.msra.mxu0 %v107
    %645 = vmatpush.msra.mxu0 %v104
    %646 = vmatpush.msra.mxu0 %v101
    %647 = vmatpush.msra.mxu0 %v98
    %648 = vmatpush.msra.mxu0 %v95
    %649 = vmatpush.msra.mxu0 %v92
    %650 = vmatpush.msra.mxu0 %v89
    %651 = vmatmul.f32.gmra.mxu0 %v587
    %v652 = vpop.f32.mrf.mxu0
    %v653 = vadd.f32 0.0, %v652
    %654 = vdwg.mxu0
    %v655 = vadd.f32 %v592, %v613
    %v656 = vxor.u32 %v655, 2147483648
    %v657 = vmul.f32 %v656, 1.442695
    %v658 = vpow.pop %v657
    %v659 = vadd.f32 %v658, 1.0
    %v660 = vrcp.pop %v659
    %v661 = vmul.f32 %v659, %v660
    %v662 = vsub.f32 1.0, %v661
    %v663 = vmul.f32 %v660, %v662
    %v664 = vadd.f32 %v660, %v663
    %vm665 = vweird.f32 %v659
    %vm666 = vweird.f32 %v660
    %vm667 = vmor %vm665, %vm666
    %v668 = vsel %vm667, %v660, %v664
    %v669 = vand.u32 2147483647, %v659
    %vm670 = vcmp.eq.f32.partialorder %v669, 8.507059e+37
    %v671 = vand.u32 %v659, 2147483648
    %v672 = vor.u32 1.1754944e-38, %v671
    %v673 = vsel %vm670, %v672, %v668
    %v674 = vmul.f32 1.0, %v673
    %v675 = vadd.f32 %v593, %v633
    %v676 = vxor.u32 %v675, 2147483648
    %v677 = vmul.f32 %v676, 1.442695
    %v678 = vpow.pop %v677
    %v679 = vadd.f32 %v678, 1.0
    %v680 = vrcp.pop %v679
    %v681 = vmul.f32 %v679, %v680
    %v682 = vsub.f32 1.0, %v681
    %v683 = vmul.f32 %v680, %v682
    %v684 = vadd.f32 %v680, %v683
    %vm685 = vweird.f32 %v679
    %vm686 = vweird.f32 %v680
    %vm687 = vmor %vm685, %vm686
    %v688 = vsel %vm687, %v680, %v684
    %v689 = vand.u32 2147483647, %v679
    %vm690 = vcmp.eq.f32.partialorder %v689, 8.507059e+37
    %v691 = vand.u32 %v679, 2147483648
    %v692 = vor.u32 1.1754944e-38, %v691
    %v693 = vsel %vm690, %v692, %v688
    %v694 = vmul.f32 1.0, %v693
    %v695 = vadd.f32 %v653, %v451
    %v696 = vmul.f32 %v674, %v695
    %v697 = vadd.f32 %v594, %v696
    %v698 = vtanh.pop %v697
    %v699 = vsub.f32 1.0, %v694
    %v700 = vmul.f32 %v699, %v698
    %v701 = vmul.f32 %v694, %v587
    %v702 = vadd.f32 %v700, %v701
    %vm703 = vcmp.gt.s32.totalorder %v86, 2
    %v704 = vsel %vm703, 1, 0
    %705 = vset.pattern.permute.xlu0 0
    %706 = vperm.xlu0 %705, %v704
    %v707 = vpop.permute.xlu0 %706
    %vm708 = vcmp.eq.s32.totalorder %v707, 1
    %v709 = vsel %vm708, %v702, %v587
    %v710 = vsel %vm708, %v702, 0.0
    %s711 = scalar_lea.vmem [#allocation3], 16
    %712 = vst [vmem:[%s711] sm:$0xff] %v710
    %s713 = scalar_lea.vmem [#allocation2], 72
    %v714 = vld [vmem:[%s713] sm:$0xff]
    %v715 = vld [vmem:[%s713 + $0x8] sm:$0xff]
    %v716 = vld [vmem:[%s713 + $0x10] sm:$0xff]
    %717 = vmatpush.msra.mxu0 %v132
    %718 = vmatpush.msra.mxu0 %v129
    %719 = vmatpush.msra.mxu0 %v126
    %720 = vmatpush.msra.mxu0 %v123
    %721 = vmatpush.msra.mxu0 %v120
    %722 = vmatpush.msra.mxu0 %v117
    %723 = vmatpush.msra.mxu0 %v114
    %724 = vmatpush.msra.mxu0 %v111
    %725 = vmatpush.msra.mxu0 %v108
    %726 = vmatpush.msra.mxu0 %v105
    %727 = vmatpush.msra.mxu0 %v102
    %728 = vmatpush.msra.mxu0 %v99
    %729 = vmatpush.msra.mxu0 %v96
    %730 = vmatpush.msra.mxu0 %v93
    %731 = vmatpush.msra.mxu0 %v90
    %732 = vmatpush.msra.mxu0 %v87
    %733 = vmatmul.f32.gmra.mxu0 %v709
    %v734 = vpop.f32.mrf.mxu0
    %v735 = vadd.f32 0.0, %v734
    %736 = vdwg.mxu0
    %737 = vmatpush.msra.mxu0 %v133
    %738 = vmatpush.msra.mxu0 %v130
    %739 = vmatpush.msra.mxu0 %v127
    %740 = vmatpush.msra.mxu0 %v124
    %741 = vmatpush.msra.mxu0 %v121
    %742 = vmatpush.msra.mxu0 %v118
    %743 = vmatpush.msra.mxu0 %v115
    %744 = vmatpush.msra.mxu0 %v112
    %745 = vmatpush.msra.mxu0 %v109
    %746 = vmatpush.msra.mxu0 %v106
    %747 = vmatpush.msra.mxu0 %v103
    %748 = vmatpush.msra.mxu0 %v100
    %749 = vmatpush.msra.mxu0 %v97
    %750 = vmatpush.msra.mxu0 %v94
    %751 = vmatpush.msra.mxu0 %v91
    %752 = vmatpush.msra.mxu0 %v88
    %753 = vmatmul.f32.gmra.mxu0 %v709
    %v754 = vpop.f32.mrf.mxu0
    %v755 = vadd.f32 0.0, %v754
    %756 = vdwg.mxu0
    %757 = vmatpush.msra.mxu0 %v134
    %758 = vmatpush.msra.mxu0 %v131
    %759 = vmatpush.msra.mxu0 %v128
    %760 = vmatpush.msra.mxu0 %v125
    %761 = vmatpush.msra.mxu0 %v122
    %762 = vmatpush.msra.mxu0 %v119
    %763 = vmatpush.msra.mxu0 %v116
    %764 = vmatpush.msra.mxu0 %v113
    %765 = vmatpush.msra.mxu0 %v110
    %766 = vmatpush.msra.mxu0 %v107
    %767 = vmatpush.msra.mxu0 %v104
    %768 = vmatpush.msra.mxu0 %v101
    %769 = vmatpush.msra.mxu0 %v98
    %770 = vmatpush.msra.mxu0 %v95
    %771 = vmatpush.msra.mxu0 %v92
    %772 = vmatpush.msra.mxu0 %v89
    %773 = vmatmul.f32.gmra.mxu0 %v709
    %v774 = vpop.f32.mrf.mxu0
    %v775 = vadd.f32 0.0, %v774
    %776 = vdwg.mxu0
    %v777 = vadd.f32 %v714, %v735
    %v778 = vxor.u32 %v777, 2147483648
    %v779 = vmul.f32 %v778, 1.442695
    %v780 = vpow.pop %v779
    %v781 = vadd.f32 %v780, 1.0
    %v782 = vrcp.pop %v781
    %v783 = vmul.f32 %v781, %v782
    %v784 = vsub.f32 1.0, %v783
    %v785 = vmul.f32 %v782, %v784
    %v786 = vadd.f32 %v782, %v785
    %vm787 = vweird.f32 %v781
    %vm788 = vweird.f32 %v782
    %vm789 = vmor %vm787, %vm788
    %v790 = vsel %vm789, %v782, %v786
    %v791 = vand.u32 2147483647, %v781
    %vm792 = vcmp.eq.f32.partialorder %v791, 8.507059e+37
    %v793 = vand.u32 %v781, 2147483648
    %v794 = vor.u32 1.1754944e-38, %v793
    %v795 = vsel %vm792, %v794, %v790
    %v796 = vmul.f32 1.0, %v795
    %v797 = vadd.f32 %v715, %v755
    %v798 = vxor.u32 %v797, 2147483648
    %v799 = vmul.f32 %v798, 1.442695
    %v800 = vpow.pop %v799
    %v801 = vadd.f32 %v800, 1.0
    %v802 = vrcp.pop %v801
    %v803 = vmul.f32 %v801, %v802
    %v804 = vsub.f32 1.0, %v803
    %v805 = vmul.f32 %v802, %v804
    %v806 = vadd.f32 %v802, %v805
    %vm807 = vweird.f32 %v801
    %vm808 = vweird.f32 %v802
    %vm809 = vmor %vm807, %vm808
    %v810 = vsel %vm809, %v802, %v806
    %v811 = vand.u32 2147483647, %v801
    %vm812 = vcmp.eq.f32.partialorder %v811, 8.507059e+37
    %v813 = vand.u32 %v801, 2147483648
    %v814 = vor.u32 1.1754944e-38, %v813
    %v815 = vsel %vm812, %v814, %v810
    %v816 = vmul.f32 1.0, %v815
    %v817 = vadd.f32 %v775, %v451
    %v818 = vmul.f32 %v796, %v817
    %v819 = vadd.f32 %v716, %v818
    %v820 = vtanh.pop %v819
    %v821 = vsub.f32 1.0, %v816
    %v822 = vmul.f32 %v821, %v820
    %v823 = vmul.f32 %v816, %v709
    %v824 = vadd.f32 %v822, %v823
    %vm825 = vcmp.gt.s32.totalorder %v86, 3
    %v826 = vsel %vm825, 1, 0
    %827 = vset.pattern.permute.xlu0 0
    %828 = vperm.xlu0 %827, %v826
    %v829 = vpop.permute.xlu0 %828
    %vm830 = vcmp.eq.s32.totalorder %v829, 1
    %v831 = vsel %vm830, %v824, %v709
    %v832 = vsel %vm830, %v824, 0.0
    %s833 = scalar_lea.vmem [#allocation3], 24
    %834 = vst [vmem:[%s833] sm:$0xff] %v832
    %s835 = scalar_lea.vmem [#allocation2], 96
    %v836 = vld [vmem:[%s835] sm:$0xff]
    %v837 = vld [vmem:[%s835 + $0x8] sm:$0xff]
    %v838 = vld [vmem:[%s835 + $0x10] sm:$0xff]
    %839 = vmatpush.msra.mxu0 %v132
    %840 = vmatpush.msra.mxu0 %v129
    %841 = vmatpush.msra.mxu0 %v126
    %842 = vmatpush.msra.mxu0 %v123
    %843 = vmatpush.msra.mxu0 %v120
    %844 = vmatpush.msra.mxu0 %v117
    %845 = vmatpush.msra.mxu0 %v114
    %846 = vmatpush.msra.mxu0 %v111
    %847 = vmatpush.msra.mxu0 %v108
    %848 = vmatpush.msra.mxu0 %v105
    %849 = vmatpush.msra.mxu0 %v102
    %850 = vmatpush.msra.mxu0 %v99
    %851 = vmatpush.msra.mxu0 %v96
    %852 = vmatpush.msra.mxu0 %v93
    %853 = vmatpush.msra.mxu0 %v90
    %854 = vmatpush.msra.mxu0 %v87
    %855 = vmatmul.f32.gmra.mxu0 %v831
    %v856 = vpop.f32.mrf.mxu0
    %v857 = vadd.f32 0.0, %v856
    %858 = vdwg.mxu0
    %859 = vmatpush.msra.mxu0 %v133
    %860 = vmatpush.msra.mxu0 %v130
    %861 = vmatpush.msra.mxu0 %v127
    %862 = vmatpush.msra.mxu0 %v124
    %863 = vmatpush.msra.mxu0 %v121
    %864 = vmatpush.msra.mxu0 %v118
    %865 = vmatpush.msra.mxu0 %v115
    %866 = vmatpush.msra.mxu0 %v112
    %867 = vmatpush.msra.mxu0 %v109
    %868 = vmatpush.msra.mxu0 %v106
    %869 = vmatpush.msra.mxu0 %v103
    %870 = vmatpush.msra.mxu0 %v100
    %871 = vmatpush.msra.mxu0 %v97
    %872 = vmatpush.msra.mxu0 %v94
    %873 = vmatpush.msra.mxu0 %v91
    %874 = vmatpush.msra.mxu0 %v88
    %875 = vmatmul.f32.gmra.mxu0 %v831
    %v876 = vpop.f32.mrf.mxu0
    %v877 = vadd.f32 0.0, %v876
    %878 = vdwg.mxu0
    %879 = vmatpush.msra.mxu0 %v134
    %880 = vmatpush.msra.mxu0 %v131
    %881 = vmatpush.msra.mxu0 %v128
    %882 = vmatpush.msra.mxu0 %v125
    %883 = vmatpush.msra.mxu0 %v122
    %884 = vmatpush.msra.mxu0 %v119
    %885 = vmatpush.msra.mxu0 %v116
    %886 = vmatpush.msra.mxu0 %v113
    %887 = vmatpush.msra.mxu0 %v110
    %888 = vmatpush.msra.mxu0 %v107
    %889 = vmatpush.msra.mxu0 %v104
    %890 = vmatpush.msra.mxu0 %v101
    %891 = vmatpush.msra.mxu0 %v98
    %892 = vmatpush.msra.mxu0 %v95
    %893 = vmatpush.msra.mxu0 %v92
    %894 = vmatpush.msra.mxu0 %v89
    %895 = vmatmul.f32.gmra.mxu0 %v831
    %v896 = vpop.f32.mrf.mxu0
    %v897 = vadd.f32 0.0, %v896
    %898 = vdwg.mxu0
    %v899 = vadd.f32 %v836, %v857
    %v900 = vxor.u32 %v899, 2147483648
    %v901 = vmul.f32 %v900, 1.442695
    %v902 = vpow.pop %v901
    %v903 = vadd.f32 %v902, 1.0
    %v904 = vrcp.pop %v903
    %v905 = vmul.f32 %v903, %v904
    %v906 = vsub.f32 1.0, %v905
    %v907 = vmul.f32 %v904, %v906
    %v908 = vadd.f32 %v904, %v907
    %vm909 = vweird.f32 %v903
    %vm910 = vweird.f32 %v904
    %vm911 = vmor %vm909, %vm910
    %v912 = vsel %vm911, %v904, %v908
    %v913 = vand.u32 2147483647, %v903
    %vm914 = vcmp.eq.f32.partialorder %v913, 8.507059e+37
    %v915 = vand.u32 %v903, 2147483648
    %v916 = vor.u32 1.1754944e-38, %v915
    %v917 = vsel %vm914, %v916, %v912
    %v918 = vmul.f32 1.0, %v917
    %v919 = vadd.f32 %v837, %v877
    %v920 = vxor.u32 %v919, 2147483648
    %v921 = vmul.f32 %v920, 1.442695
    %v922 = vpow.pop %v921
    %v923 = vadd.f32 %v922, 1.0
    %v924 = vrcp.pop %v923
    %v925 = vmul.f32 %v923, %v924
    %v926 = vsub.f32 1.0, %v925
    %v927 = vmul.f32 %v924, %v926
    %v928 = vadd.f32 %v924, %v927
    %vm929 = vweird.f32 %v923
    %vm930 = vweird.f32 %v924
    %vm931 = vmor %vm929, %vm930
    %v932 = vsel %vm931, %v924, %v928
    %v933 = vand.u32 2147483647, %v923
    %vm934 = vcmp.eq.f32.partialorder %v933, 8.507059e+37
    %v935 = vand.u32 %v923, 2147483648
    %v936 = vor.u32 1.1754944e-38, %v935
    %v937 = vsel %vm934, %v936, %v932
    %v938 = vmul.f32 1.0, %v937
    %v939 = vadd.f32 %v897, %v451
    %v940 = vmul.f32 %v918, %v939
    %v941 = vadd.f32 %v838, %v940
    %v942 = vtanh.pop %v941
    %v943 = vsub.f32 1.0, %v938
    %v944 = vmul.f32 %v943, %v942
    %v945 = vmul.f32 %v938, %v831
    %v946 = vadd.f32 %v944, %v945
    %vm947 = vcmp.gt.s32.totalorder %v86, 4
    %v948 = vsel %vm947, 1, 0
    %949 = vset.pattern.permute.xlu0 0
    %950 = vperm.xlu0 %949, %v948
    %v951 = vpop.permute.xlu0 %950
    %vm952 = vcmp.eq.s32.totalorder %v951, 1
    %v953 = vsel %vm952, %v946, %v831
    %v954 = vsel %vm952, %v946, 0.0
    %s955 = scalar_lea.vmem [#allocation3], 32
    %956 = vst [vmem:[%s955] sm:$0xff] %v954
    %s957 = scalar_lea.vmem [#allocation2], 120
    %v958 = vld [vmem:[%s957] sm:$0xff]
    %v959 = vld [vmem:[%s957 + $0x8] sm:$0xff]
    %v960 = vld [vmem:[%s957 + $0x10] sm:$0xff]
    %961 = vmatpush.msra.mxu0 %v132
    %962 = vmatpush.msra.mxu0 %v129
    %963 = vmatpush.msra.mxu0 %v126
    %964 = vmatpush.msra.mxu0 %v123
    %965 = vmatpush.msra.mxu0 %v120
    %966 = vmatpush.msra.mxu0 %v117
    %967 = vmatpush.msra.mxu0 %v114
    %968 = vmatpush.msra.mxu0 %v111
    %969 = vmatpush.msra.mxu0 %v108
    %970 = vmatpush.msra.mxu0 %v105
    %971 = vmatpush.msra.mxu0 %v102
    %972 = vmatpush.msra.mxu0 %v99
    %973 = vmatpush.msra.mxu0 %v96
    %974 = vmatpush.msra.mxu0 %v93
    %975 = vmatpush.msra.mxu0 %v90
    %976 = vmatpush.msra.mxu0 %v87
    %977 = vmatmul.f32.gmra.mxu0 %v953
    %v978 = vpop.f32.mrf.mxu0
    %v979 = vadd.f32 0.0, %v978
    %980 = vdwg.mxu0
    %981 = vmatpush.msra.mxu0 %v133
    %982 = vmatpush.msra.mxu0 %v130
    %983 = vmatpush.msra.mxu0 %v127
    %984 = vmatpush.msra.mxu0 %v124
    %985 = vmatpush.msra.mxu0 %v121
    %986 = vmatpush.msra.mxu0 %v118
    %987 = vmatpush.msra.mxu0 %v115
    %988 = vmatpush.msra.mxu0 %v112
    %989 = vmatpush.msra.mxu0 %v109
    %990 = vmatpush.msra.mxu0 %v106
    %991 = vmatpush.msra.mxu0 %v103
    %992 = vmatpush.msra.mxu0 %v100
    %993 = vmatpush.msra.mxu0 %v97
    %994 = vmatpush.msra.mxu0 %v94
    %995 = vmatpush.msra.mxu0 %v91
    %996 = vmatpush.msra.mxu0 %v88
    %997 = vmatmul.f32.gmra.mxu0 %v953
    %v998 = vpop.f32.mrf.mxu0
    %v999 = vadd.f32 0.0, %v998
    %1000 = vdwg.mxu0
    %1001 = vmatpush.msra.mxu0 %v134
    %1002 = vmatpush.msra.mxu0 %v131
    %1003 = vmatpush.msra.mxu0 %v128
    %1004 = vmatpush.msra.mxu0 %v125
    %1005 = vmatpush.msra.mxu0 %v122
    %1006 = vmatpush.msra.mxu0 %v119
    %1007 = vmatpush.msra.mxu0 %v116
    %1008 = vmatpush.msra.mxu0 %v113
    %1009 = vmatpush.msra.mxu0 %v110
    %1010 = vmatpush.msra.mxu0 %v107
    %1011 = vmatpush.msra.mxu0 %v104
    %1012 = vmatpush.msra.mxu0 %v101
    %1013 = vmatpush.msra.mxu0 %v98
    %1014 = vmatpush.msra.mxu0 %v95
    %1015 = vmatpush.msra.mxu0 %v92
    %1016 = vmatpush.msra.mxu0 %v89
    %1017 = vmatmul.f32.gmra.mxu0 %v953
    %v1018 = vpop.f32.mrf.mxu0
    %v1019 = vadd.f32 0.0, %v1018
    %1020 = vdwg.mxu0
    %v1021 = vadd.f32 %v958, %v979
    %v1022 = vxor.u32 %v1021, 2147483648
    %v1023 = vmul.f32 %v1022, 1.442695
    %v1024 = vpow.pop %v1023
    %v1025 = vadd.f32 %v1024, 1.0
    %v1026 = vrcp.pop %v1025
    %v1027 = vmul.f32 %v1025, %v1026
    %v1028 = vsub.f32 1.0, %v1027
    %v1029 = vmul.f32 %v1026, %v1028
    %v1030 = vadd.f32 %v1026, %v1029
    %vm1031 = vweird.f32 %v1025
    %vm1032 = vweird.f32 %v1026
    %vm1033 = vmor %vm1031, %vm1032
    %v1034 = vsel %vm1033, %v1026, %v1030
    %v1035 = vand.u32 2147483647, %v1025
    %vm1036 = vcmp.eq.f32.partialorder %v1035, 8.507059e+37
    %v1037 = vand.u32 %v1025, 2147483648
    %v1038 = vor.u32 1.1754944e-38, %v1037
    %v1039 = vsel %vm1036, %v1038, %v1034
    %v1040 = vmul.f32 1.0, %v1039
    %v1041 = vadd.f32 %v959, %v999
    %v1042 = vxor.u32 %v1041, 2147483648
    %v1043 = vmul.f32 %v1042, 1.442695
    %v1044 = vpow.pop %v1043
    %v1045 = vadd.f32 %v1044, 1.0
    %v1046 = vrcp.pop %v1045
    %v1047 = vmul.f32 %v1045, %v1046
    %v1048 = vsub.f32 1.0, %v1047
    %v1049 = vmul.f32 %v1046, %v1048
    %v1050 = vadd.f32 %v1046, %v1049
    %vm1051 = vweird.f32 %v1045
    %vm1052 = vweird.f32 %v1046
    %vm1053 = vmor %vm1051, %vm1052
    %v1054 = vsel %vm1053, %v1046, %v1050
    %v1055 = vand.u32 2147483647, %v1045
    %vm1056 = vcmp.eq.f32.partialorder %v1055, 8.507059e+37
    %v1057 = vand.u32 %v1045, 2147483648
    %v1058 = vor.u32 1.1754944e-38, %v1057
    %v1059 = vsel %vm1056, %v1058, %v1054
    %v1060 = vmul.f32 1.0, %v1059
    %v1061 = vadd.f32 %v1019, %v451
    %v1062 = vmul.f32 %v1040, %v1061
    %v1063 = vadd.f32 %v960, %v1062
    %v1064 = vtanh.pop %v1063
    %v1065 = vsub.f32 1.0, %v1060
    %v1066 = vmul.f32 %v1065, %v1064
    %v1067 = vmul.f32 %v1060, %v953
    %v1068 = vadd.f32 %v1066, %v1067
    %vm1069 = vcmp.gt.s32.totalorder %v86, 5
    %v1070 = vsel %vm1069, 1, 0
    %1071 = vset.pattern.permute.xlu0 0
    %1072 = vperm.xlu0 %1071, %v1070
    %v1073 = vpop.permute.xlu0 %1072
    %vm1074 = vcmp.eq.s32.totalorder %v1073, 1
    %v1075 = vsel %vm1074, %v1068, %v953
    %v1076 = vsel %vm1074, %v1068, 0.0
    %s1077 = scalar_lea.vmem [#allocation3], 40
    %1078 = vst [vmem:[%s1077] sm:$0xff] %v1076
    %s1079 = scalar_lea.vmem [#allocation2], 144
    %v1080 = vld [vmem:[%s1079] sm:$0xff]
    %v1081 = vld [vmem:[%s1079 + $0x8] sm:$0xff]
    %v1082 = vld [vmem:[%s1079 + $0x10] sm:$0xff]
    %1083 = vmatpush.msra.mxu0 %v132
    %1084 = vmatpush.msra.mxu0 %v129
    %1085 = vmatpush.msra.mxu0 %v126
    %1086 = vmatpush.msra.mxu0 %v123
    %1087 = vmatpush.msra.mxu0 %v120
    %1088 = vmatpush.msra.mxu0 %v117
    %1089 = vmatpush.msra.mxu0 %v114
    %1090 = vmatpush.msra.mxu0 %v111
    %1091 = vmatpush.msra.mxu0 %v108
    %1092 = vmatpush.msra.mxu0 %v105
    %1093 = vmatpush.msra.mxu0 %v102
    %1094 = vmatpush.msra.mxu0 %v99
    %1095 = vmatpush.msra.mxu0 %v96
    %1096 = vmatpush.msra.mxu0 %v93
    %1097 = vmatpush.msra.mxu0 %v90
    %1098 = vmatpush.msra.mxu0 %v87
    %1099 = vmatmul.f32.gmra.mxu0 %v1075
    %v1100 = vpop.f32.mrf.mxu0
    %v1101 = vadd.f32 0.0, %v1100
    %1102 = vdwg.mxu0
    %1103 = vmatpush.msra.mxu0 %v133
    %1104 = vmatpush.msra.mxu0 %v130
    %1105 = vmatpush.msra.mxu0 %v127
    %1106 = vmatpush.msra.mxu0 %v124
    %1107 = vmatpush.msra.mxu0 %v121
    %1108 = vmatpush.msra.mxu0 %v118
    %1109 = vmatpush.msra.mxu0 %v115
    %1110 = vmatpush.msra.mxu0 %v112
    %1111 = vmatpush.msra.mxu0 %v109
    %1112 = vmatpush.msra.mxu0 %v106
    %1113 = vmatpush.msra.mxu0 %v103
    %1114 = vmatpush.msra.mxu0 %v100
    %1115 = vmatpush.msra.mxu0 %v97
    %1116 = vmatpush.msra.mxu0 %v94
    %1117 = vmatpush.msra.mxu0 %v91
    %1118 = vmatpush.msra.mxu0 %v88
    %1119 = vmatmul.f32.gmra.mxu0 %v1075
    %v1120 = vpop.f32.mrf.mxu0
    %v1121 = vadd.f32 0.0, %v1120
    %1122 = vdwg.mxu0
    %1123 = vmatpush.msra.mxu0 %v134
    %1124 = vmatpush.msra.mxu0 %v131
    %1125 = vmatpush.msra.mxu0 %v128
    %1126 = vmatpush.msra.mxu0 %v125
    %1127 = vmatpush.msra.mxu0 %v122
    %1128 = vmatpush.msra.mxu0 %v119
    %1129 = vmatpush.msra.mxu0 %v116
    %1130 = vmatpush.msra.mxu0 %v113
    %1131 = vmatpush.msra.mxu0 %v110
    %1132 = vmatpush.msra.mxu0 %v107
    %1133 = vmatpush.msra.mxu0 %v104
    %1134 = vmatpush.msra.mxu0 %v101
    %1135 = vmatpush.msra.mxu0 %v98
    %1136 = vmatpush.msra.mxu0 %v95
    %1137 = vmatpush.msra.mxu0 %v92
    %1138 = vmatpush.msra.mxu0 %v89
    %1139 = vmatmul.f32.gmra.mxu0 %v1075
    %v1140 = vpop.f32.mrf.mxu0
    %v1141 = vadd.f32 0.0, %v1140
    %1142 = vdwg.mxu0
    %v1143 = vadd.f32 %v1080, %v1101
    %v1144 = vxor.u32 %v1143, 2147483648
    %v1145 = vmul.f32 %v1144, 1.442695
    %v1146 = vpow.pop %v1145
    %v1147 = vadd.f32 %v1146, 1.0
    %v1148 = vrcp.pop %v1147
    %v1149 = vmul.f32 %v1147, %v1148
    %v1150 = vsub.f32 1.0, %v1149
    %v1151 = vmul.f32 %v1148, %v1150
    %v1152 = vadd.f32 %v1148, %v1151
    %vm1153 = vweird.f32 %v1147
    %vm1154 = vweird.f32 %v1148
    %vm1155 = vmor %vm1153, %vm1154
    %v1156 = vsel %vm1155, %v1148, %v1152
    %v1157 = vand.u32 2147483647, %v1147
    %vm1158 = vcmp.eq.f32.partialorder %v1157, 8.507059e+37
    %v1159 = vand.u32 %v1147, 2147483648
    %v1160 = vor.u32 1.1754944e-38, %v1159
    %v1161 = vsel %vm1158, %v1160, %v1156
    %v1162 = vmul.f32 1.0, %v1161
    %v1163 = vadd.f32 %v1081, %v1121
    %v1164 = vxor.u32 %v1163, 2147483648
    %v1165 = vmul.f32 %v1164, 1.442695
    %v1166 = vpow.pop %v1165
    %v1167 = vadd.f32 %v1166, 1.0
    %v1168 = vrcp.pop %v1167
    %v1169 = vmul.f32 %v1167, %v1168
    %v1170 = vsub.f32 1.0, %v1169
    %v1171 = vmul.f32 %v1168, %v1170
    %v1172 = vadd.f32 %v1168, %v1171
    %vm1173 = vweird.f32 %v1167
    %vm1174 = vweird.f32 %v1168
    %vm1175 = vmor %vm1173, %vm1174
    %v1176 = vsel %vm1175, %v1168, %v1172
    %v1177 = vand.u32 2147483647, %v1167
    %vm1178 = vcmp.eq.f32.partialorder %v1177, 8.507059e+37
    %v1179 = vand.u32 %v1167, 2147483648
    %v1180 = vor.u32 1.1754944e-38, %v1179
    %v1181 = vsel %vm1178, %v1180, %v1176
    %v1182 = vmul.f32 1.0, %v1181
    %v1183 = vadd.f32 %v1141, %v451
    %v1184 = vmul.f32 %v1162, %v1183
    %v1185 = vadd.f32 %v1082, %v1184
    %v1186 = vtanh.pop %v1185
    %v1187 = vsub.f32 1.0, %v1182
    %v1188 = vmul.f32 %v1187, %v1186
    %v1189 = vmul.f32 %v1182, %v1075
    %v1190 = vadd.f32 %v1188, %v1189
    %vm1191 = vcmp.gt.s32.totalorder %v86, 6
    %v1192 = vsel %vm1191, 1, 0
    %1193 = vset.pattern.permute.xlu0 0
    %1194 = vperm.xlu0 %1193, %v1192
    %v1195 = vpop.permute.xlu0 %1194
    %vm1196 = vcmp.eq.s32.totalorder %v1195, 1
    %v1197 = vsel %vm1196, %v1190, %v1075
    %v1198 = vsel %vm1196, %v1190, 0.0
    %s1199 = scalar_lea.vmem [#allocation3], 48
    %1200 = vst [vmem:[%s1199] sm:$0xff] %v1198
    %s1201 = scalar_lea.vmem [#allocation2], 168
    %v1202 = vld [vmem:[%s1201] sm:$0xff]
    %v1203 = vld [vmem:[%s1201 + $0x8] sm:$0xff]
    %v1204 = vld [vmem:[%s1201 + $0x10] sm:$0xff]
    %1205 = vmatpush.msra.mxu0 %v132
    %1206 = vmatpush.msra.mxu0 %v129
    %1207 = vmatpush.msra.mxu0 %v126
    %1208 = vmatpush.msra.mxu0 %v123
    %1209 = vmatpush.msra.mxu0 %v120
    %1210 = vmatpush.msra.mxu0 %v117
    %1211 = vmatpush.msra.mxu0 %v114
    %1212 = vmatpush.msra.mxu0 %v111
    %1213 = vmatpush.msra.mxu0 %v108
    %1214 = vmatpush.msra.mxu0 %v105
    %1215 = vmatpush.msra.mxu0 %v102
    %1216 = vmatpush.msra.mxu0 %v99
    %1217 = vmatpush.msra.mxu0 %v96
    %1218 = vmatpush.msra.mxu0 %v93
    %1219 = vmatpush.msra.mxu0 %v90
    %1220 = vmatpush.msra.mxu0 %v87
    %1221 = vmatmul.f32.gmra.mxu0 %v1197
    %v1222 = vpop.f32.mrf.mxu0
    %v1223 = vadd.f32 0.0, %v1222
    %1224 = vdwg.mxu0
    %1225 = vmatpush.msra.mxu0 %v133
    %1226 = vmatpush.msra.mxu0 %v130
    %1227 = vmatpush.msra.mxu0 %v127
    %1228 = vmatpush.msra.mxu0 %v124
    %1229 = vmatpush.msra.mxu0 %v121
    %1230 = vmatpush.msra.mxu0 %v118
    %1231 = vmatpush.msra.mxu0 %v115
    %1232 = vmatpush.msra.mxu0 %v112
    %1233 = vmatpush.msra.mxu0 %v109
    %1234 = vmatpush.msra.mxu0 %v106
    %1235 = vmatpush.msra.mxu0 %v103
    %1236 = vmatpush.msra.mxu0 %v100
    %1237 = vmatpush.msra.mxu0 %v97
    %1238 = vmatpush.msra.mxu0 %v94
    %1239 = vmatpush.msra.mxu0 %v91
    %1240 = vmatpush.msra.mxu0 %v88
    %1241 = vmatmul.f32.gmra.mxu0 %v1197
    %v1242 = vpop.f32.mrf.mxu0
    %v1243 = vadd.f32 0.0, %v1242
    %1244 = vdwg.mxu0
    %1245 = vmatpush.msra.mxu0 %v134
    %1246 = vmatpush.msra.mxu0 %v131
    %1247 = vmatpush.msra.mxu0 %v128
    %1248 = vmatpush.msra.mxu0 %v125
    %1249 = vmatpush.msra.mxu0 %v122
    %1250 = vmatpush.msra.mxu0 %v119
    %1251 = vmatpush.msra.mxu0 %v116
    %1252 = vmatpush.msra.mxu0 %v113
    %1253 = vmatpush.msra.mxu0 %v110
    %1254 = vmatpush.msra.mxu0 %v107
    %1255 = vmatpush.msra.mxu0 %v104
    %1256 = vmatpush.msra.mxu0 %v101
    %1257 = vmatpush.msra.mxu0 %v98
    %1258 = vmatpush.msra.mxu0 %v95
    %1259 = vmatpush.msra.mxu0 %v92
    %1260 = vmatpush.msra.mxu0 %v89
    %1261 = vmatmul.f32.gmra.mxu0 %v1197
    %v1262 = vpop.f32.mrf.mxu0
    %v1263 = vadd.f32 0.0, %v1262
    %1264 = vdwg.mxu0
    %v1265 = vadd.f32 %v1202, %v1223
    %v1266 = vxor.u32 %v1265, 2147483648
    %v1267 = vmul.f32 %v1266, 1.442695
    %v1268 = vpow.pop %v1267
    %v1269 = vadd.f32 %v1268, 1.0
    %v1270 = vrcp.pop %v1269
    %v1271 = vmul.f32 %v1269, %v1270
    %v1272 = vsub.f32 1.0, %v1271
    %v1273 = vmul.f32 %v1270, %v1272
    %v1274 = vadd.f32 %v1270, %v1273
    %vm1275 = vweird.f32 %v1269
    %vm1276 = vweird.f32 %v1270
    %vm1277 = vmor %vm1275, %vm1276
    %v1278 = vsel %vm1277, %v1270, %v1274
    %v1279 = vand.u32 2147483647, %v1269
    %vm1280 = vcmp.eq.f32.partialorder %v1279, 8.507059e+37
    %v1281 = vand.u32 %v1269, 2147483648
    %v1282 = vor.u32 1.1754944e-38, %v1281
    %v1283 = vsel %vm1280, %v1282, %v1278
    %v1284 = vmul.f32 1.0, %v1283
    %v1285 = vadd.f32 %v1203, %v1243
    %v1286 = vxor.u32 %v1285, 2147483648
    %v1287 = vmul.f32 %v1286, 1.442695
    %v1288 = vpow.pop %v1287
    %v1289 = vadd.f32 %v1288, 1.0
    %v1290 = vrcp.pop %v1289
    %v1291 = vmul.f32 %v1289, %v1290
    %v1292 = vsub.f32 1.0, %v1291
    %v1293 = vmul.f32 %v1290, %v1292
    %v1294 = vadd.f32 %v1290, %v1293
    %vm1295 = vweird.f32 %v1289
    %vm1296 = vweird.f32 %v1290
    %vm1297 = vmor %vm1295, %vm1296
    %v1298 = vsel %vm1297, %v1290, %v1294
    %v1299 = vand.u32 2147483647, %v1289
    %vm1300 = vcmp.eq.f32.partialorder %v1299, 8.507059e+37
    %v1301 = vand.u32 %v1289, 2147483648
    %v1302 = vor.u32 1.1754944e-38, %v1301
    %v1303 = vsel %vm1300, %v1302, %v1298
    %v1304 = vmul.f32 1.0, %v1303
    %v1305 = vadd.f32 %v1263, %v451
    %v1306 = vmul.f32 %v1284, %v1305
    %v1307 = vadd.f32 %v1204, %v1306
    %v1308 = vtanh.pop %v1307
    %v1309 = vsub.f32 1.0, %v1304
    %v1310 = vmul.f32 %v1309, %v1308
    %v1311 = vmul.f32 %v1304, %v1197
    %v1312 = vadd.f32 %v1310, %v1311
    %vm1313 = vcmp.gt.s32.totalorder %v86, 7
    %v1314 = vsel %vm1313, 1, 0
    %1315 = vset.pattern.permute.xlu0 0
    %1316 = vperm.xlu0 %1315, %v1314
    %v1317 = vpop.permute.xlu0 %1316
    %vm1318 = vcmp.eq.s32.totalorder %v1317, 1
    %v1319 = vsel %vm1318, %v1312, 0.0
    %s1320 = scalar_lea.vmem [#allocation3], 56
    %1321 = vst [vmem:[%s1320] sm:$0xff] %v1319
    %v1322 = vld [vmem:[#allocation3] sm:$0xff]
    %v1323 = vld [vmem:[#allocation3 + $0x8] sm:$0xff]
    %v1324 = vld [vmem:[#allocation3 + $0x10] sm:$0xff]
    %v1325 = vld [vmem:[#allocation3 + $0x18] sm:$0xff]
    %v1326 = vld [vmem:[#allocation3 + $0x20] sm:$0xff]
    %v1327 = vld [vmem:[#allocation3 + $0x28] sm:$0xff]
    %v1328 = vld [vmem:[#allocation3 + $0x30] sm:$0xff]
    %v1329 = vld [vmem:[#allocation3 + $0x38] sm:$0xff]
    %v1330 = vld [vmem:[%s7] sm:$0xff]
    %v1331 = vld [vmem:[%s7 + $0x8] sm:$0xff]
    %v1332 = vld [vmem:[%s7 + $0x10] sm:$0xff]
    %v1333 = vld [vmem:[%s7 + $0x18] sm:$0xff]
    %v1334 = vld [vmem:[%s7 + $0x20] sm:$0xff]
    %v1335 = vld [vmem:[%s7 + $0x28] sm:$0xff]
    %v1336 = vld [vmem:[%s7 + $0x30] sm:$0xff]
    %v1337 = vld [vmem:[%s7 + $0x38] sm:$0xff]
    %v1338 = vld [vmem:[%s7 + $0x40] sm:$0xff]
    %v1339 = vld [vmem:[%s7 + $0x48] sm:$0xff]
    %v1340 = vld [vmem:[%s7 + $0x50] sm:$0xff]
    %v1341 = vld [vmem:[%s7 + $0x58] sm:$0xff]
    %v1342 = vld [vmem:[%s7 + $0x60] sm:$0xff]
    %v1343 = vld [vmem:[%s7 + $0x68] sm:$0xff]
    %v1344 = vld [vmem:[%s7 + $0x70] sm:$0xff]
    %v1345 = vld [vmem:[%s7 + $0x78] sm:$0xff]
    %v1346 = vld [vmem:[%s10] sm:$0x1]
    %v1348 = vperm.slane %v1346, 0
    %1350 = vmatpush.msra.mxu0 %v1345
    %1351 = vmatpush.msra.mxu0 %v1344
    %1352 = vmatpush.msra.mxu0 %v1343
    %1353 = vmatpush.msra.mxu0 %v1342
    %1354 = vmatpush.msra.mxu0 %v1341
    %1355 = vmatpush.msra.mxu0 %v1340
    %1356 = vmatpush.msra.mxu0 %v1339
    %1357 = vmatpush.msra.mxu0 %v1338
    %1358 = vmatpush.msra.mxu0 %v1337
    %1359 = vmatpush.msra.mxu0 %v1336
    %1360 = vmatpush.msra.mxu0 %v1335
    %1361 = vmatpush.msra.mxu0 %v1334
    %1362 = vmatpush.msra.mxu0 %v1333
    %1363 = vmatpush.msra.mxu0 %v1332
    %1364 = vmatpush.msra.mxu0 %v1331
    %1365 = vmatpush.msra.mxu0 %v1330
    %1366 = vmatmul.f32.gmra.mxu0 %v85
    %v1367 = vpop.f32.mrf.mxu0
    %v1368 = vadd.f32 %v1348, %v1367
    %1369 = vdwg.mxu0
    %v1370 = vmul.f32 %v1322, %v85
    %v1371 = vmul.f32 %v1323, %v85
    %v1372 = vmul.f32 %v1324, %v85
    %v1373 = vmul.f32 %v1325, %v85
    %v1374 = vmul.f32 %v1326, %v85
    %v1375 = vmul.f32 %v1327, %v85
    %v1376 = vmul.f32 %v1328, %v85
    %v1377 = vmul.f32 %v1329, %v85
    %v1378 = vld [vmem:[%s8] sm:$0xff]
    %v1379 = vld [vmem:[%s8 + $0x8] sm:$0xff]
    %v1380 = vld [vmem:[%s8 + $0x10] sm:$0xff]
    %v1381 = vld [vmem:[%s8 + $0x18] sm:$0xff]
    %v1382 = vld [vmem:[%s8 + $0x20] sm:$0xff]
    %v1383 = vld [vmem:[%s8 + $0x28] sm:$0xff]
    %v1384 = vld [vmem:[%s8 + $0x30] sm:$0xff]
    %v1385 = vld [vmem:[%s8 + $0x38] sm:$0xff]
    %v1386 = vld [vmem:[%s8 + $0x40] sm:$0xff]
    %v1387 = vld [vmem:[%s8 + $0x48] sm:$0xff]
    %v1388 = vld [vmem:[%s8 + $0x50] sm:$0xff]
    %v1389 = vld [vmem:[%s8 + $0x58] sm:$0xff]
    %v1390 = vld [vmem:[%s8 + $0x60] sm:$0xff]
    %v1391 = vld [vmem:[%s8 + $0x68] sm:$0xff]
    %v1392 = vld [vmem:[%s8 + $0x70] sm:$0xff]
    %v1393 = vld [vmem:[%s8 + $0x78] sm:$0xff]
    %v1394 = vld [vmem:[%s9] sm:$0xff]
    %v1395 = vld [vmem:[%s9 + $0x8] sm:$0xff]
    %v1396 = vld [vmem:[%s9 + $0x10] sm:$0xff]
    %v1397 = vld [vmem:[%s9 + $0x18] sm:$0xff]
    %v1398 = vld [vmem:[%s9 + $0x20] sm:$0xff]
    %v1399 = vld [vmem:[%s9 + $0x28] sm:$0xff]
    %v1400 = vld [vmem:[%s9 + $0x30] sm:$0xff]
    %v1401 = vld [vmem:[%s9 + $0x38] sm:$0xff]
    %v1402 = vld [vmem:[%s9 + $0x40] sm:$0xff]
    %v1403 = vld [vmem:[%s9 + $0x48] sm:$0xff]
    %v1404 = vld [vmem:[%s9 + $0x50] sm:$0xff]
    %v1405 = vld [vmem:[%s9 + $0x58] sm:$0xff]
    %v1406 = vld [vmem:[%s9 + $0x60] sm:$0xff]
    %v1407 = vld [vmem:[%s9 + $0x68] sm:$0xff]
    %v1408 = vld [vmem:[%s9 + $0x70] sm:$0xff]
    %v1409 = vld [vmem:[%s9 + $0x78] sm:$0xff]
    %1410 = vmatpush.msra.mxu0 %v1409
    %1411 = vmatpush.msra.mxu0 %v1408
    %1412 = vmatpush.msra.mxu0 %v1407
    %1413 = vmatpush.msra.mxu0 %v1406
    %1414 = vmatpush.msra.mxu0 %v1405
    %1415 = vmatpush.msra.mxu0 %v1404
    %1416 = vmatpush.msra.mxu0 %v1403
    %1417 = vmatpush.msra.mxu0 %v1402
    %1418 = vmatpush.msra.mxu0 %v1401
    %1419 = vmatpush.msra.mxu0 %v1400
    %1420 = vmatpush.msra.mxu0 %v1399
    %1421 = vmatpush.msra.mxu0 %v1398
    %1422 = vmatpush.msra.mxu0 %v1397
    %1423 = vmatpush.msra.mxu0 %v1396
    %1424 = vmatpush.msra.mxu0 %v1395
    %1425 = vmatpush.msra.mxu0 %v1394
    %1426 = vmatmul.f32.gmra.mxu0 %v1370
    %v1427 = vpop.f32.mrf.mxu0
    %v1428 = vadd.f32 0.0, %v1427
    %1429 = vmatmul.f32.gmra.mxu0 %v1371
    %v1430 = vpop.f32.mrf.mxu0
    %v1431 = vadd.f32 0.0, %v1430
    %1432 = vmatmul.f32.gmra.mxu0 %v1372
    %v1433 = vpop.f32.mrf.mxu0
    %v1434 = vadd.f32 0.0, %v1433
    %1435 = vmatmul.f32.gmra.mxu0 %v1373
    %v1436 = vpop.f32.mrf.mxu0
    %v1437 = vadd.f32 0.0, %v1436
    %1438 = vmatmul.f32.gmra.mxu0 %v1374
    %v1439 = vpop.f32.mrf.mxu0
    %v1440 = vadd.f32 0.0, %v1439
    %1441 = vmatmul.f32.gmra.mxu0 %v1375
    %v1442 = vpop.f32.mrf.mxu0
    %v1443 = vadd.f32 0.0, %v1442
    %1444 = vmatmul.f32.gmra.mxu0 %v1376
    %v1445 = vpop.f32.mrf.mxu0
    %v1446 = vadd.f32 0.0, %v1445
    %1447 = vmatmul.f32.gmra.mxu0 %v1377
    %v1448 = vpop.f32.mrf.mxu0
    %v1449 = vadd.f32 0.0, %v1448
    %1450 = vdwg.mxu0
    %1451 = vmatpush.msra.mxu0 %v1393
    %1452 = vmatpush.msra.mxu0 %v1392
    %1453 = vmatpush.msra.mxu0 %v1391
    %1454 = vmatpush.msra.mxu0 %v1390
    %1455 = vmatpush.msra.mxu0 %v1389
    %1456 = vmatpush.msra.mxu0 %v1388
    %1457 = vmatpush.msra.mxu0 %v1387
    %1458 = vmatpush.msra.mxu0 %v1386
    %1459 = vmatpush.msra.mxu0 %v1385
    %1460 = vmatpush.msra.mxu0 %v1384
    %1461 = vmatpush.msra.mxu0 %v1383
    %1462 = vmatpush.msra.mxu0 %v1382
    %1463 = vmatpush.msra.mxu0 %v1381
    %1464 = vmatpush.msra.mxu0 %v1380
    %1465 = vmatpush.msra.mxu0 %v1379
    %1466 = vmatpush.msra.mxu0 %v1378
    %1467 = vmatmul.f32.gmra.mxu0 %v1322
    %v1468 = vpop.f32.mrf.mxu0
    %v1469 = vadd.f32 %v1428, %v1468
    %1470 = vmatmul.f32.gmra.mxu0 %v1323
    %v1471 = vpop.f32.mrf.mxu0
    %v1472 = vadd.f32 %v1431, %v1471
    %1473 = vmatmul.f32.gmra.mxu0 %v1324
    %v1474 = vpop.f32.mrf.mxu0
    %v1475 = vadd.f32 %v1434, %v1474
    %1476 = vmatmul.f32.gmra.mxu0 %v1325
    %v1477 = vpop.f32.mrf.mxu0
    %v1478 = vadd.f32 %v1437, %v1477
    %1479 = vmatmul.f32.gmra.mxu0 %v1326
    %v1480 = vpop.f32.mrf.mxu0
    %v1481 = vadd.f32 %v1440, %v1480
    %1482 = vmatmul.f32.gmra.mxu0 %v1327
    %v1483 = vpop.f32.mrf.mxu0
    %v1484 = vadd.f32 %v1443, %v1483
    %1485 = vmatmul.f32.gmra.mxu0 %v1328
    %v1486 = vpop.f32.mrf.mxu0
    %v1487 = vadd.f32 %v1446, %v1486
    %1488 = vmatmul.f32.gmra.mxu0 %v1329
    %v1489 = vpop.f32.mrf.mxu0
    %v1490 = vadd.f32 %v1449, %v1489
    %1491 = vdwg.mxu0
    %v1492 = vadd.f32 %v1469, %v1368
    %v1493 = vadd.f32 %v1472, %v1368
    %v1494 = vadd.f32 %v1475, %v1368
    %v1495 = vadd.f32 %v1478, %v1368
    %v1496 = vadd.f32 %v1481, %v1368
    %v1497 = vadd.f32 %v1484, %v1368
    %v1498 = vadd.f32 %v1487, %v1368
    %v1499 = vadd.f32 %v1490, %v1368
    %v1500 = vxor.u32 %v1492, 2147483648
    %v1501 = vxor.u32 %v1493, 2147483648
    %v1502 = vxor.u32 %v1494, 2147483648
    %v1503 = vxor.u32 %v1495, 2147483648
    %v1504 = vxor.u32 %v1496, 2147483648
    %v1505 = vxor.u32 %v1497, 2147483648
    %v1506 = vxor.u32 %v1498, 2147483648
    %v1507 = vxor.u32 %v1499, 2147483648
    %v1508 = vmul.f32 %v1500, 1.442695
    %v1509 = vpow.pop %v1508
    %v1510 = vmul.f32 %v1501, 1.442695
    %v1511 = vpow.pop %v1510
    %v1512 = vmul.f32 %v1502, 1.442695
    %v1513 = vpow.pop %v1512
    %v1514 = vmul.f32 %v1503, 1.442695
    %v1515 = vpow.pop %v1514
    %v1516 = vmul.f32 %v1504, 1.442695
    %v1517 = vpow.pop %v1516
    %v1518 = vmul.f32 %v1505, 1.442695
    %v1519 = vpow.pop %v1518
    %v1520 = vmul.f32 %v1506, 1.442695
    %v1521 = vpow.pop %v1520
    %v1522 = vmul.f32 %v1507, 1.442695
    %v1523 = vpow.pop %v1522
    %v1524 = vadd.f32 %v1509, 1.0
    %v1525 = vadd.f32 %v1511, 1.0
    %v1526 = vadd.f32 %v1513, 1.0
    %v1527 = vadd.f32 %v1515, 1.0
    %v1528 = vadd.f32 %v1517, 1.0
    %v1529 = vadd.f32 %v1519, 1.0
    %v1530 = vadd.f32 %v1521, 1.0
    %v1531 = vadd.f32 %v1523, 1.0
    %v1532 = vrcp.pop %v1524
    %v1533 = vmul.f32 %v1524, %v1532
    %v1534 = vsub.f32 1.0, %v1533
    %v1535 = vmul.f32 %v1532, %v1534
    %v1536 = vadd.f32 %v1532, %v1535
    %vm1537 = vweird.f32 %v1524
    %vm1538 = vweird.f32 %v1532
    %vm1539 = vmor %vm1537, %vm1538
    %v1540 = vsel %vm1539, %v1532, %v1536
    %v1541 = vand.u32 2147483647, %v1524
    %vm1542 = vcmp.eq.f32.partialorder %v1541, 8.507059e+37
    %v1543 = vand.u32 %v1524, 2147483648
    %v1544 = vor.u32 1.1754944e-38, %v1543
    %v1545 = vsel %vm1542, %v1544, %v1540
    %v1546 = vmul.f32 1.0, %v1545
    %v1547 = vrcp.pop %v1525
    %v1548 = vmul.f32 %v1525, %v1547
    %v1549 = vsub.f32 1.0, %v1548
    %v1550 = vmul.f32 %v1547, %v1549
    %v1551 = vadd.f32 %v1547, %v1550
    %vm1552 = vweird.f32 %v1525
    %vm1553 = vweird.f32 %v1547
    %vm1554 = vmor %vm1552, %vm1553
    %v1555 = vsel %vm1554, %v1547, %v1551
    %v1556 = vand.u32 2147483647, %v1525
    %vm1557 = vcmp.eq.f32.partialorder %v1556, 8.507059e+37
    %v1558 = vand.u32 %v1525, 2147483648
    %v1559 = vor.u32 1.1754944e-38, %v1558
    %v1560 = vsel %vm1557, %v1559, %v1555
    %v1561 = vmul.f32 1.0, %v1560
    %v1562 = vrcp.pop %v1526
    %v1563 = vmul.f32 %v1526, %v1562
    %v1564 = vsub.f32 1.0, %v1563
    %v1565 = vmul.f32 %v1562, %v1564
    %v1566 = vadd.f32 %v1562, %v1565
    %vm1567 = vweird.f32 %v1526
    %vm1568 = vweird.f32 %v1562
    %vm1569 = vmor %vm1567, %vm1568
    %v1570 = vsel %vm1569, %v1562, %v1566
    %v1571 = vand.u32 2147483647, %v1526
    %vm1572 = vcmp.eq.f32.partialorder %v1571, 8.507059e+37
    %v1573 = vand.u32 %v1526, 2147483648
    %v1574 = vor.u32 1.1754944e-38, %v1573
    %v1575 = vsel %vm1572, %v1574, %v1570
    %v1576 = vmul.f32 1.0, %v1575
    %v1577 = vrcp.pop %v1527
    %v1578 = vmul.f32 %v1527, %v1577
    %v1579 = vsub.f32 1.0, %v1578
    %v1580 = vmul.f32 %v1577, %v1579
    %v1581 = vadd.f32 %v1577, %v1580
    %vm1582 = vweird.f32 %v1527
    %vm1583 = vweird.f32 %v1577
    %vm1584 = vmor %vm1582, %vm1583
    %v1585 = vsel %vm1584, %v1577, %v1581
    %v1586 = vand.u32 2147483647, %v1527
    %vm1587 = vcmp.eq.f32.partialorder %v1586, 8.507059e+37
    %v1588 = vand.u32 %v1527, 2147483648
    %v1589 = vor.u32 1.1754944e-38, %v1588
    %v1590 = vsel %vm1587, %v1589, %v1585
    %v1591 = vmul.f32 1.0, %v1590
    %v1592 = vrcp.pop %v1528
    %v1593 = vmul.f32 %v1528, %v1592
    %v1594 = vsub.f32 1.0, %v1593
    %v1595 = vmul.f32 %v1592, %v1594
    %v1596 = vadd.f32 %v1592, %v1595
    %vm1597 = vweird.f32 %v1528
    %vm1598 = vweird.f32 %v1592
    %vm1599 = vmor %vm1597, %vm1598
    %v1600 = vsel %vm1599, %v1592, %v1596
    %v1601 = vand.u32 2147483647, %v1528
    %vm1602 = vcmp.eq.f32.partialorder %v1601, 8.507059e+37
    %v1603 = vand.u32 %v1528, 2147483648
    %v1604 = vor.u32 1.1754944e-38, %v1603
    %v1605 = vsel %vm1602, %v1604, %v1600
    %v1606 = vmul.f32 1.0, %v1605
    %v1607 = vrcp.pop %v1529
    %v1608 = vmul.f32 %v1529, %v1607
    %v1609 = vsub.f32 1.0, %v1608
    %v1610 = vmul.f32 %v1607, %v1609
    %v1611 = vadd.f32 %v1607, %v1610
    %vm1612 = vweird.f32 %v1529
    %vm1613 = vweird.f32 %v1607
    %vm1614 = vmor %vm1612, %vm1613
    %v1615 = vsel %vm1614, %v1607, %v1611
    %v1616 = vand.u32 2147483647, %v1529
    %vm1617 = vcmp.eq.f32.partialorder %v1616, 8.507059e+37
    %v1618 = vand.u32 %v1529, 2147483648
    %v1619 = vor.u32 1.1754944e-38, %v1618
    %v1620 = vsel %vm1617, %v1619, %v1615
    %v1621 = vmul.f32 1.0, %v1620
    %v1622 = vrcp.pop %v1530
    %v1623 = vmul.f32 %v1530, %v1622
    %v1624 = vsub.f32 1.0, %v1623
    %v1625 = vmul.f32 %v1622, %v1624
    %v1626 = vadd.f32 %v1622, %v1625
    %vm1627 = vweird.f32 %v1530
    %vm1628 = vweird.f32 %v1622
    %vm1629 = vmor %vm1627, %vm1628
    %v1630 = vsel %vm1629, %v1622, %v1626
    %v1631 = vand.u32 2147483647, %v1530
    %vm1632 = vcmp.eq.f32.partialorder %v1631, 8.507059e+37
    %v1633 = vand.u32 %v1530, 2147483648
    %v1634 = vor.u32 1.1754944e-38, %v1633
    %v1635 = vsel %vm1632, %v1634, %v1630
    %v1636 = vmul.f32 1.0, %v1635
    %v1637 = vrcp.pop %v1531
    %v1638 = vmul.f32 %v1531, %v1637
    %v1639 = vsub.f32 1.0, %v1638
    %v1640 = vmul.f32 %v1637, %v1639
    %v1641 = vadd.f32 %v1637, %v1640
    %vm1642 = vweird.f32 %v1531
    %vm1643 = vweird.f32 %v1637
    %vm1644 = vmor %vm1642, %vm1643
    %v1645 = vsel %vm1644, %v1637, %v1641
    %v1646 = vand.u32 2147483647, %v1531
    %vm1647 = vcmp.eq.f32.partialorder %v1646, 8.507059e+37
    %v1648 = vand.u32 %v1531, 2147483648
    %v1649 = vor.u32 1.1754944e-38, %v1648
    %v1650 = vsel %vm1647, %v1649, %v1645
    %v1651 = vmul.f32 1.0, %v1650
    %v1652 = vld [vmem:[%s11] sm:$0xff]
    %v1653 = vld [vmem:[%s11 + $0x8] sm:$0xff]
    %v1654 = vld [vmem:[%s11 + $0x10] sm:$0xff]
    %v1655 = vld [vmem:[%s11 + $0x18] sm:$0xff]
    %v1656 = vld [vmem:[%s11 + $0x20] sm:$0xff]
    %v1657 = vld [vmem:[%s11 + $0x28] sm:$0xff]
    %v1658 = vld [vmem:[%s11 + $0x30] sm:$0xff]
    %v1659 = vld [vmem:[%s11 + $0x38] sm:$0xff]
    %v1660 = vld [vmem:[%s12] sm:$0x1]
    %v1662 = vperm.slane %v1660, 0
    %vm1664 = vcmask 523264
    %v1666 = vsel %vm1664, %v1546, 0
    %v1669 = vsel %vm1664, %v1561, 0
    %v1672 = vsel %vm1664, %v1576, 0
    %v1675 = vsel %vm1664, %v1591, 0
    %v1678 = vsel %vm1664, %v1606, 0
    %v1681 = vsel %vm1664, %v1621, 0
    %v1684 = vsel %vm1664, %v1636, 0
    %v1687 = vsel %vm1664, %v1651, 0
    %1689 = vmatpush.msra.mxu0 0.0
    %1690 = vmatpush.msra.mxu0 0.0
    %1691 = vmatpush.msra.mxu0 0.0
    %1692 = vmatpush.msra.mxu0 0.0
    %1693 = vmatpush.msra.mxu0 0.0
    %1694 = vmatpush.msra.mxu0 0.0
    %1695 = vmatpush.msra.mxu0 0.0
    %1696 = vmatpush.msra.mxu0 0.0
    %1697 = vmatpush.msra.mxu0 %v1659
    %1698 = vmatpush.msra.mxu0 %v1658
    %1699 = vmatpush.msra.mxu0 %v1657
    %1700 = vmatpush.msra.mxu0 %v1656
    %1701 = vmatpush.msra.mxu0 %v1655
    %1702 = vmatpush.msra.mxu0 %v1654
    %1703 = vmatpush.msra.mxu0 %v1653
    %1704 = vmatpush.msra.mxu0 %v1652
    %1705 = vmatmul.f32.gmra.mxu0 %v1666
    %v1706 = vpop.f32.mrf.mxu0
    %v1707 = vadd.f32 %v1662, %v1706
    %1708 = vmatmul.f32.gmra.mxu0 %v1669
    %v1709 = vpop.f32.mrf.mxu0
    %v1710 = vadd.f32 %v1662, %v1709
    %1711 = vmatmul.f32.gmra.mxu0 %v1672
    %v1712 = vpop.f32.mrf.mxu0
    %v1713 = vadd.f32 %v1662, %v1712
    %1714 = vmatmul.f32.gmra.mxu0 %v1675
    %v1715 = vpop.f32.mrf.mxu0
    %v1716 = vadd.f32 %v1662, %v1715
    %1717 = vmatmul.f32.gmra.mxu0 %v1678
    %v1718 = vpop.f32.mrf.mxu0
    %v1719 = vadd.f32 %v1662, %v1718
    %1720 = vmatmul.f32.gmra.mxu0 %v1681
    %v1721 = vpop.f32.mrf.mxu0
    %v1722 = vadd.f32 %v1662, %v1721
    %1723 = vmatmul.f32.gmra.mxu0 %v1684
    %v1724 = vpop.f32.mrf.mxu0
    %v1725 = vadd.f32 %v1662, %v1724
    %1726 = vmatmul.f32.gmra.mxu0 %v1687
    %v1727 = vpop.f32.mrf.mxu0
    %v1728 = vadd.f32 %v1662, %v1727
    %1729 = vdwg.mxu0
    %v1730 = vxor.u32 %v1707, 2147483648
    %v1731 = vxor.u32 %v1710, 2147483648
    %v1732 = vxor.u32 %v1713, 2147483648
    %v1733 = vxor.u32 %v1716, 2147483648
    %v1734 = vxor.u32 %v1719, 2147483648
    %v1735 = vxor.u32 %v1722, 2147483648
    %v1736 = vxor.u32 %v1725, 2147483648
    %v1737 = vxor.u32 %v1728, 2147483648
    %v1738 = vmul.f32 %v1730, 1.442695
    %v1739 = vpow.pop %v1738
    %v1740 = vmul.f32 %v1731, 1.442695
    %v1741 = vpow.pop %v1740
    %v1742 = vmul.f32 %v1732, 1.442695
    %v1743 = vpow.pop %v1742
    %v1744 = vmul.f32 %v1733, 1.442695
    %v1745 = vpow.pop %v1744
    %v1746 = vmul.f32 %v1734, 1.442695
    %v1747 = vpow.pop %v1746
    %v1748 = vmul.f32 %v1735, 1.442695
    %v1749 = vpow.pop %v1748
    %v1750 = vmul.f32 %v1736, 1.442695
    %v1751 = vpow.pop %v1750
    %v1752 = vmul.f32 %v1737, 1.442695
    %v1753 = vpow.pop %v1752
    %v1754 = vadd.f32 %v1739, 1.0
    %v1755 = vadd.f32 %v1741, 1.0
    %v1756 = vadd.f32 %v1743, 1.0
    %v1757 = vadd.f32 %v1745, 1.0
    %v1758 = vadd.f32 %v1747, 1.0
    %v1759 = vadd.f32 %v1749, 1.0
    %v1760 = vadd.f32 %v1751, 1.0
    %v1761 = vadd.f32 %v1753, 1.0
    %v1762 = vrcp.pop %v1754
    %v1763 = vmul.f32 %v1754, %v1762
    %v1764 = vsub.f32 1.0, %v1763
    %v1765 = vmul.f32 %v1762, %v1764
    %v1766 = vadd.f32 %v1762, %v1765
    %vm1767 = vweird.f32 %v1754
    %vm1768 = vweird.f32 %v1762
    %vm1769 = vmor %vm1767, %vm1768
    %v1770 = vsel %vm1769, %v1762, %v1766
    %v1771 = vand.u32 2147483647, %v1754
    %vm1772 = vcmp.eq.f32.partialorder %v1771, 8.507059e+37
    %v1773 = vand.u32 %v1754, 2147483648
    %v1774 = vor.u32 1.1754944e-38, %v1773
    %v1775 = vsel %vm1772, %v1774, %v1770
    %v1776 = vmul.f32 1.0, %v1775
    %v1777 = vrcp.pop %v1755
    %v1778 = vmul.f32 %v1755, %v1777
    %v1779 = vsub.f32 1.0, %v1778
    %v1780 = vmul.f32 %v1777, %v1779
    %v1781 = vadd.f32 %v1777, %v1780
    %vm1782 = vweird.f32 %v1755
    %vm1783 = vweird.f32 %v1777
    %vm1784 = vmor %vm1782, %vm1783
    %v1785 = vsel %vm1784, %v1777, %v1781
    %v1786 = vand.u32 2147483647, %v1755
    %vm1787 = vcmp.eq.f32.partialorder %v1786, 8.507059e+37
    %v1788 = vand.u32 %v1755, 2147483648
    %v1789 = vor.u32 1.1754944e-38, %v1788
    %v1790 = vsel %vm1787, %v1789, %v1785
    %v1791 = vmul.f32 1.0, %v1790
    %v1792 = vrcp.pop %v1756
    %v1793 = vmul.f32 %v1756, %v1792
    %v1794 = vsub.f32 1.0, %v1793
    %v1795 = vmul.f32 %v1792, %v1794
    %v1796 = vadd.f32 %v1792, %v1795
    %vm1797 = vweird.f32 %v1756
    %vm1798 = vweird.f32 %v1792
    %vm1799 = vmor %vm1797, %vm1798
    %v1800 = vsel %vm1799, %v1792, %v1796
    %v1801 = vand.u32 2147483647, %v1756
    %vm1802 = vcmp.eq.f32.partialorder %v1801, 8.507059e+37
    %v1803 = vand.u32 %v1756, 2147483648
    %v1804 = vor.u32 1.1754944e-38, %v1803
    %v1805 = vsel %vm1802, %v1804, %v1800
    %v1806 = vmul.f32 1.0, %v1805
    %v1807 = vrcp.pop %v1757
    %v1808 = vmul.f32 %v1757, %v1807
    %v1809 = vsub.f32 1.0, %v1808
    %v1810 = vmul.f32 %v1807, %v1809
    %v1811 = vadd.f32 %v1807, %v1810
    %vm1812 = vweird.f32 %v1757
    %vm1813 = vweird.f32 %v1807
    %vm1814 = vmor %vm1812, %vm1813
    %v1815 = vsel %vm1814, %v1807, %v1811
    %v1816 = vand.u32 2147483647, %v1757
    %vm1817 = vcmp.eq.f32.partialorder %v1816, 8.507059e+37
    %v1818 = vand.u32 %v1757, 2147483648
    %v1819 = vor.u32 1.1754944e-38, %v1818
    %v1820 = vsel %vm1817, %v1819, %v1815
    %v1821 = vmul.f32 1.0, %v1820
    %v1822 = vrcp.pop %v1758
    %v1823 = vmul.f32 %v1758, %v1822
    %v1824 = vsub.f32 1.0, %v1823
    %v1825 = vmul.f32 %v1822, %v1824
    %v1826 = vadd.f32 %v1822, %v1825
    %vm1827 = vweird.f32 %v1758
    %vm1828 = vweird.f32 %v1822
    %vm1829 = vmor %vm1827, %vm1828
    %v1830 = vsel %vm1829, %v1822, %v1826
    %v1831 = vand.u32 2147483647, %v1758
    %vm1832 = vcmp.eq.f32.partialorder %v1831, 8.507059e+37
    %v1833 = vand.u32 %v1758, 2147483648
    %v1834 = vor.u32 1.1754944e-38, %v1833
    %v1835 = vsel %vm1832, %v1834, %v1830
    %v1836 = vmul.f32 1.0, %v1835
    %v1837 = vrcp.pop %v1759
    %v1838 = vmul.f32 %v1759, %v1837
    %v1839 = vsub.f32 1.0, %v1838
    %v1840 = vmul.f32 %v1837, %v1839
    %v1841 = vadd.f32 %v1837, %v1840
    %vm1842 = vweird.f32 %v1759
    %vm1843 = vweird.f32 %v1837
    %vm1844 = vmor %vm1842, %vm1843
    %v1845 = vsel %vm1844, %v1837, %v1841
    %v1846 = vand.u32 2147483647, %v1759
    %vm1847 = vcmp.eq.f32.partialorder %v1846, 8.507059e+37
    %v1848 = vand.u32 %v1759, 2147483648
    %v1849 = vor.u32 1.1754944e-38, %v1848
    %v1850 = vsel %vm1847, %v1849, %v1845
    %v1851 = vmul.f32 1.0, %v1850
    %v1852 = vrcp.pop %v1760
    %v1853 = vmul.f32 %v1760, %v1852
    %v1854 = vsub.f32 1.0, %v1853
    %v1855 = vmul.f32 %v1852, %v1854
    %v1856 = vadd.f32 %v1852, %v1855
    %vm1857 = vweird.f32 %v1760
    %vm1858 = vweird.f32 %v1852
    %vm1859 = vmor %vm1857, %vm1858
    %v1860 = vsel %vm1859, %v1852, %v1856
    %v1861 = vand.u32 2147483647, %v1760
    %vm1862 = vcmp.eq.f32.partialorder %v1861, 8.507059e+37
    %v1863 = vand.u32 %v1760, 2147483648
    %v1864 = vor.u32 1.1754944e-38, %v1863
    %v1865 = vsel %vm1862, %v1864, %v1860
    %v1866 = vmul.f32 1.0, %v1865
    %v1867 = vrcp.pop %v1761
    %v1868 = vmul.f32 %v1761, %v1867
    %v1869 = vsub.f32 1.0, %v1868
    %v1870 = vmul.f32 %v1867, %v1869
    %v1871 = vadd.f32 %v1867, %v1870
    %vm1872 = vweird.f32 %v1761
    %vm1873 = vweird.f32 %v1867
    %vm1874 = vmor %vm1872, %vm1873
    %v1875 = vsel %vm1874, %v1867, %v1871
    %v1876 = vand.u32 2147483647, %v1761
    %vm1877 = vcmp.eq.f32.partialorder %v1876, 8.507059e+37
    %v1878 = vand.u32 %v1761, 2147483648
    %v1879 = vor.u32 1.1754944e-38, %v1878
    %v1880 = vsel %vm1877, %v1879, %v1875
    %v1881 = vmul.f32 1.0, %v1880
    %v1882 = vld [vmem:[%s13] sm:$0xff]
    %v1883 = vld [vmem:[%s13 + $0x8] sm:$0xff]
    %v1884 = vld [vmem:[#allocation4] sm:$0x1]
    %v1886 = vperm.slane %v1884, 0
    %vm1888 = vcmask 130048
    %v1890 = vsel %vm1888, %v1776, 0
    %v1893 = vsel %vm1888, %v1791, 0
    %v1896 = vsel %vm1888, %v1806, 0
    %v1899 = vsel %vm1888, %v1821, 0
    %v1902 = vsel %vm1888, %v1836, 0
    %v1905 = vsel %vm1888, %v1851, 0
    %v1908 = vsel %vm1888, %v1866, 0
    %v1911 = vsel %vm1888, %v1881, 0
    %1913 = vmatpush.msra.mxu0 0.0
    %1914 = vmatpush.msra.mxu0 0.0
    %1915 = vmatpush.msra.mxu0 0.0
    %1916 = vmatpush.msra.mxu0 0.0
    %1917 = vmatpush.msra.mxu0 0.0
    %1918 = vmatpush.msra.mxu0 0.0
    %1919 = vmatpush.msra.mxu0 0.0
    %1920 = vmatpush.msra.mxu0 0.0
    %1921 = vmatpush.msra.mxu0 0.0
    %1922 = vmatpush.msra.mxu0 0.0
    %1923 = vmatpush.msra.mxu0 0.0
    %1924 = vmatpush.msra.mxu0 0.0
    %1925 = vmatpush.msra.mxu0 0.0
    %1926 = vmatpush.msra.mxu0 0.0
    %1927 = vmatpush.msra.mxu0 %v1883
    %1928 = vmatpush.msra.mxu0 %v1882
    %1929 = vmatmul.f32.gmra.mxu0 %v1890
    %v1930 = vpop.f32.mrf.mxu0
    %v1931 = vadd.f32 %v1886, %v1930
    %1932 = vmatmul.f32.gmra.mxu0 %v1893
    %v1933 = vpop.f32.mrf.mxu0
    %v1934 = vadd.f32 %v1886, %v1933
    %1935 = vmatmul.f32.gmra.mxu0 %v1896
    %v1936 = vpop.f32.mrf.mxu0
    %v1937 = vadd.f32 %v1886, %v1936
    %1938 = vmatmul.f32.gmra.mxu0 %v1899
    %v1939 = vpop.f32.mrf.mxu0
    %v1940 = vadd.f32 %v1886, %v1939
    %1941 = vmatmul.f32.gmra.mxu0 %v1902
    %v1942 = vpop.f32.mrf.mxu0
    %v1943 = vadd.f32 %v1886, %v1942
    %1944 = vmatmul.f32.gmra.mxu0 %v1905
    %v1945 = vpop.f32.mrf.mxu0
    %v1946 = vadd.f32 %v1886, %v1945
    %1947 = vmatmul.f32.gmra.mxu0 %v1908
    %v1948 = vpop.f32.mrf.mxu0
    %v1949 = vadd.f32 %v1886, %v1948
    %1950 = vmatmul.f32.gmra.mxu0 %v1911
    %v1951 = vpop.f32.mrf.mxu0
    %v1952 = vadd.f32 %v1886, %v1951
    %1953 = vdwg.mxu0
    %v1954 = vsel %vm461, %v1931, 0.0
    %v1955 = vsel %vm581, %v1934, 0.0
    %v1956 = vsel %vm703, %v1937, 0.0
    %v1957 = vsel %vm825, %v1940, 0.0
    %v1958 = vsel %vm947, %v1943, 0.0
    %v1959 = vsel %vm1069, %v1946, 0.0
    %v1960 = vsel %vm1191, %v1949, 0.0
    %v1961 = vsel %vm1313, %v1952, 0.0
    %1963 = vset.pattern.permute.xlu0 0
    %1964 = vperm.xlu0 %1963, %v1954
    %v1965 = vpop.permute.xlu0 %1964
    %1968 = vset.pattern.permute.xlu0 0
    %1969 = vperm.xlu0 %1968, %v1955
    %v1970 = vpop.permute.xlu0 %1969
    %1973 = vset.pattern.permute.xlu0 0
    %1974 = vperm.xlu0 %1973, %v1956
    %v1975 = vpop.permute.xlu0 %1974
    %1978 = vset.pattern.permute.xlu0 0
    %1979 = vperm.xlu0 %1978, %v1957
    %v1980 = vpop.permute.xlu0 %1979
    %1983 = vset.pattern.permute.xlu0 0
    %1984 = vperm.xlu0 %1983, %v1958
    %v1985 = vpop.permute.xlu0 %1984
    %1988 = vset.pattern.permute.xlu0 0
    %1989 = vperm.xlu0 %1988, %v1959
    %v1990 = vpop.permute.xlu0 %1989
    %1993 = vset.pattern.permute.xlu0 0
    %1994 = vperm.xlu0 %1993, %v1960
    %v1995 = vpop.permute.xlu0 %1994
    %1998 = vset.pattern.permute.xlu0 0
    %1999 = vperm.xlu0 %1998, %v1961
    %v2000 = vpop.permute.xlu0 %1999
    %v2002 = vmul.f32 %v1965, %v1322
    %v2003 = vmul.f32 %v1970, %v1323
    %v2004 = vmul.f32 %v1975, %v1324
    %v2005 = vmul.f32 %v1980, %v1325
    %v2006 = vmul.f32 %v1985, %v1326
    %v2007 = vmul.f32 %v1990, %v1327
    %v2008 = vmul.f32 %v1995, %v1328
    %v2009 = vmul.f32 %v2000, %v1329
    %v2010 = vadd.f32 %v2002, %v2003
    %v2011 = vadd.f32 %v2010, %v2004
    %v2012 = vadd.f32 %v2011, %v2005
    %v2013 = vadd.f32 %v2012, %v2006
    %v2014 = vadd.f32 %v2013, %v2007
    %v2015 = vadd.f32 %v2014, %v2008
    %v2016 = vadd.f32 %v2015, %v2009
    %2017 = vst [vmem:[#allocation10] sm:$0xff] %v2016
    // Predicated region
    $region70: #{tpu_custom_call.1} parent=1 // pred_check
      _
    $region71: #{tpu_custom_call.1} parent=1 // pred_check_branch
      %2019 = sbr.rel (0) target = $region73
    $region72: #{tpu_custom_call.1} parent=1 // pred_region
      %2021 = vsyncadd [#allocation7], 0
      %s2023 = sshll.u32 [#allocation10], 4
      %s2024 = int_to_ptr.vmem [resolvable:$true] %s2023
      %s2025 = sshll.u32 %s15, 4
      %s2026 = int_to_ptr.hbm [resolvable:$true] %s2025
      %2028 = dma.vmem_to_hbm [thread:$0]  %s2024, 128, %s2026, [#allocation7]
    $region73: #{tpu_custom_call.1} parent=1 // pred_fallthru
      _
    // Predicated region
    $region74: #{tpu_custom_call.1} parent=1 // pred_check
      _
    $region75: #{tpu_custom_call.1} parent=1 // pred_check_branch
      %2030 = sbr.rel (0) target = $region77
    $region76: #{tpu_custom_call.1} parent=1 // pred_region
      %2032 = dma.done [#allocation7], 128
    $region77: #{tpu_custom_call.1} parent=1 // pred_fallthru
      _
    %2033 = vsyncpa [#allocation6], 1
    %2034 = vsyncpa [#allocation9], 1
    %2035 = vsyncpa [#allocation7], 1

</llo_original>
